<compile_context>
chip_gen: v5e
topology: v5e:2x2
jax: 0.10.0
libtpu: 0.0.40
codegen_flags: <defaults>
</compile_context>

<pallas_src>
import jax
import jax.numpy as jnp
import numpy as np
from jax.experimental import pallas as pl
from jax.experimental.pallas import tpu as pltpu

# ----------------------------- config ("args") -------------------------------
B = 2                      # batch
SENT_LEN = 8               # sent_len
WORD_DIM = 32              # args.word_dim
H = 32                     # args.hidden_size
DT = 16                    # args.tag_emb_dim
WORD_TAG_VOCAB = 8         # args.word_tag_vocab_size
CONS_TAG_VOCAB = 8         # args.cons_tag_vocab_size
VOCAB = WORD_TAG_VOCAB + CONS_TAG_VOCAB
T = 2 * SENT_LEN - 1       # action_len


# ------------------------- fused leaf-prep kernel -----------------------------
# Computes, in one pallas_call:
#   xf      = tanh(x      @ w_leaf + b_leaf)    (B*SENT_LEN, 2H)
#   tagleaf = tanh(tag_e  @ w_tl   + b_tl)      (B*SENT_LEN, 2DT)
def _leaf_kernel(x_ref, te_ref, wl_ref, bl_ref, wt_ref, bt_ref, xo_ref, to_ref):
    xo_ref[...] = jnp.tanh(
        jnp.dot(x_ref[...], wl_ref[...], preferred_element_type=jnp.float32)
        + bl_ref[...])
    to_ref[...] = jnp.tanh(
        jnp.dot(te_ref[...], wt_ref[...], preferred_element_type=jnp.float32)
        + bt_ref[...])


def leaf_prep(x2d, tag_e2d, w_leaf, b_leaf, w_tl, b_tl):
    return pl.pallas_call(
        _leaf_kernel,
        out_shape=(jax.ShapeDtypeStruct((x2d.shape[0], w_leaf.shape[1]), jnp.float32),
                   jax.ShapeDtypeStruct((x2d.shape[0], w_tl.shape[1]), jnp.float32)),
    )(x2d, tag_e2d, w_leaf, b_leaf, w_tl, b_tl)


# ------------------------- shift-reduce TreeLSTM kernel -----------------------
def _shift_reduce_kernel(a_s,                                        # SMEM prefetch
                         xf_ref, tagleaf_ref, ptag_ref,
                         w_word_ref, b_word_ref, w_tag_ref, b_tag_ref,
                         out_ref,
                         S, Stag, Q, cur):
    b = pl.program_id(0)

    # --- init per-sequence state (scratch persists across grid steps) ---
    S[...] = jnp.zeros_like(S)
    Stag[...] = jnp.zeros_like(Stag)
    for i in range(SENT_LEN + 2):
        Q[i] = 0
    cur[0] = 0      # buffer_cursor
    cur[1] = 1      # queue_cursor
    cur[2] = 0      # tag_cursor

    S[0] = xf_ref[0]          # S[:, 0] = x[:, 0]

    def step(t, carry):
        action = a_s[b, t - 1]
        is_shift = action == 1
        is_reduce = action == 2

        # default: S[:, t] = S[:, t-1] -- only needed when neither branch writes
        @pl.when(jnp.logical_not(jnp.logical_or(is_shift, is_reduce)))
        def _pad():
            S[t] = S[t - 1]

        @pl.when(is_shift)
        def _shift():
            bc = cur[0]
            S[t] = xf_ref[bc]              # (1, 2H) row copy
            Stag[t] = tagleaf_ref[bc]      # (1, 2DT) row copy (pre-computed leaf)
            cur[0] = bc + 1
            qc = cur[1] + 1
            cur[1] = qc
            Q[qc] = t

        @pl.when(is_reduce)
        def _reduce():
            qc = cur[1]
            l_idx = Q[qc - 1]
            r_idx = Q[qc]
            sl = S[l_idx]                  # (1, 2H)   = [h_l | c_l]
            sr = S[r_idx]
            tl = Stag[l_idx]               # (1, 2DT)  = [h_lt | c_lt]
            tr = Stag[r_idx]

            tc = cur[2]
            ptag = ptag_ref[tc]            # (1, DT) pre-gathered cons-tag embedding

            # ---- tag-level TreeLSTM_with_cell_input (single fused matmul) ----
            tag_in = jnp.concatenate([tl[:, :DT], tr[:, :DT], ptag], axis=-1)  # (1, 3DT)
            g = jnp.dot(tag_in, w_tag_ref[...],
                        preferred_element_type=jnp.float32) + b_tag_ref[...]   # (1, 5DT)
            i_g = jax.nn.sigmoid(g[:, 0 * DT:1 * DT])
            fl_g = jax.nn.sigmoid(g[:, 1 * DT:2 * DT])
            fr_g = jax.nn.sigmoid(g[:, 2 * DT:3 * DT])
            o_g = jax.nn.sigmoid(g[:, 3 * DT:4 * DT])
            u_g = jnp.tanh(g[:, 4 * DT:5 * DT])
            c_tag = i_g * u_g + fl_g * tl[:, DT:] + fr_g * tr[:, DT:]
            h_tag = o_g * jnp.tanh(c_tag)
            Stag[t] = jnp.concatenate([h_tag, c_tag], axis=-1)                 # (1, 2DT)
            cur[2] = tc + 1

            # ---- word-level TreeLSTM conditioned on the tag hidden state ----
            word_in = jnp.concatenate([sl[:, :H], sr[:, :H], h_tag], axis=-1)  # (1, 2H+DT)
            gw = jnp.dot(word_in, w_word_ref[...],
                         preferred_element_type=jnp.float32) + b_word_ref[...] # (1, 5H)
            i_w = jax.nn.sigmoid(gw[:, 0 * H:1 * H])
            fl_w = jax.nn.sigmoid(gw[:, 1 * H:2 * H])
            fr_w = jax.nn.sigmoid(gw[:, 2 * H:3 * H])
            o_w = jax.nn.sigmoid(gw[:, 3 * H:4 * H])
            u_w = jnp.tanh(gw[:, 4 * H:5 * H])
            c_w = i_w * u_w + fl_w * sl[:, H:] + fr_w * sr[:, H:]
            h_w = o_w * jnp.tanh(c_w)
            S[t] = jnp.concatenate([h_w, c_w], axis=-1)                        # (1, 2H)

            qc2 = qc - 1
            cur[1] = qc2
            Q[qc2] = t

        return carry

    jax.lax.fori_loop(1, T + 1, step, 0)

    # result = S[:, T].chunk(2, -1)[0]   (the h half)
    out_ref[...] = S[T][:, :H]


@jax.jit
def encoder_forward(x, x_len, a, a_len, word_tag, cons_tag, params):
    # x_len / a_len are unused on the use_leafLSTM == 0 path (kept for API parity)
    del x_len, a_len

    # ---- leaf prep (hoisted out of the serial loop): one fused Pallas matmul ----
    wt_emb = params['emb'][word_tag.reshape(-1)]                  # (B*SL, DT) gather in XLA
    xf2d, tl2d = leaf_prep(x.reshape(B * SENT_LEN, WORD_DIM), wt_emb,
                           params['w_leaf'], params['b_leaf'],
                           params['w_tl'], params['b_tl'])
    xf = jnp.concatenate([xf2d.reshape(B, SENT_LEN, 2 * H),
                          jnp.zeros((B, 1, 2 * H), jnp.float32)], axis=1)
    xf = xf[:, :, None, :]                                        # (B, SL+1, 1, 2H)
    tagleaf = jnp.concatenate([tl2d.reshape(B, SENT_LEN, 2 * DT),
                               jnp.zeros((B, 1, 2 * DT), jnp.float32)], axis=1)
    tagleaf = tagleaf[:, :, None, :]                              # (B, SL+1, 1, 2DT)
    ptag = params['emb'][cons_tag + WORD_TAG_VOCAB][:, :, None, :]  # (B, T, 1, DT)

    # ---- fuse the three gate matmuls per TreeLSTM level into one ----
    w_word = jnp.concatenate([params['w_wt_l'], params['w_wt_r'],
                              params['w_wt_e']], axis=0)          # (2H+DT, 5H)
    w_tag = jnp.concatenate([params['w_tt_l'], params['w_tt_r'],
                             params['w_tt_x']], axis=0)           # (3DT, 5DT)

    full = lambda b, *_: (0, 0)
    grid_spec = pltpu.PrefetchScalarGridSpec(
        num_scalar_prefetch=1,
        grid=(B,),
        in_specs=[
            pl.BlockSpec((None, SENT_LEN + 1, 1, 2 * H), lambda b, *_: (b, 0, 0, 0)),
            pl.BlockSpec((None, SENT_LEN + 1, 1, 2 * DT), lambda b, *_: (b, 0, 0, 0)),
            pl.BlockSpec((None, T, 1, DT), lambda b, *_: (b, 0, 0, 0)),
            pl.BlockSpec((2 * H + DT, 5 * H), full),
            pl.BlockSpec((1, 5 * H), full),
            pl.BlockSpec((3 * DT, 5 * DT), full),
            pl.BlockSpec((1, 5 * DT), full),
        ],
        out_specs=pl.BlockSpec((None, 1, H), lambda b, *_: (b, 0, 0)),
        scratch_shapes=[
            pltpu.VMEM((T + 1, 1, 2 * H), jnp.float32),    # S      : [h | c]
            pltpu.VMEM((T + 1, 1, 2 * DT), jnp.float32),   # S_tag  : [h | c]
            pltpu.SMEM((SENT_LEN + 2,), jnp.int32),        # Q
            pltpu.SMEM((3,), jnp.int32),                   # buffer/queue/tag cursors
        ],
    )

    out = pl.pallas_call(
        _shift_reduce_kernel,
        grid_spec=grid_spec,
        out_shape=jax.ShapeDtypeStruct((B, 1, H), jnp.float32),
        compiler_params=pltpu.CompilerParams(dimension_semantics=("parallel",)),
    )(a.astype(jnp.int32),
      xf, tagleaf, ptag,
      w_word, params['b_wt'], w_tag, params['b_tt'])
    return out.reshape(B, H)


# ----------------------------- pure-numpy reference ---------------------------
def reference_forward(x, a, word_tag, cons_tag, p):
    def sig(v):
        return 1.0 / (1.0 + np.exp(-v))

    xf = np.tanh(x @ p['w_leaf'] + p['b_leaf'])
    xf = np.concatenate([xf, np.zeros((B, 1, 2 * H), np.float32)], axis=1)
    S = np.zeros((B, T + 1, 2 * H), np.float32)
    S[:, 0] = xf[:, 0]
    Stag = np.zeros((B, T + 1, 2 * DT), np.float32)
    Q = np.zeros((B, SENT_LEN + 2), np.int64)
    buf = np.zeros(B, np.int64)
    qc = np.ones(B, np.int64)
    tc = np.zeros(B, np.int64)
    for t in range(1, T + 1):
        S[:, t] = S[:, t - 1]
        for bi in range(B):
            act = a[bi, t - 1]
            if act == 1:
                S[bi, t] = xf[bi, buf[bi]]
                e = p['emb'][word_tag[bi, buf[bi]]]
                Stag[bi, t] = np.tanh(e @ p['w_tl'] + p['b_tl'][0])
                buf[bi] += 1
                qc[bi] += 1
                Q[bi, qc[bi]] = t
            elif act == 2:
                l, r = Q[bi, qc[bi] - 1], Q[bi, qc[bi]]
                hl, cl = S[bi, l][:H], S[bi, l][H:]
                hr, cr = S[bi, r][:H], S[bi, r][H:]
                hlt, clt = Stag[bi, l][:DT], Stag[bi, l][DT:]
                hrt, crt = Stag[bi, r][:DT], Stag[bi, r][DT:]
                ptag = p['emb'][cons_tag[bi, tc[bi]] + WORD_TAG_VOCAB]
                g = (hlt @ p['w_tt_l'] + hrt @ p['w_tt_r'] +
                     ptag @ p['w_tt_x'] + p['b_tt'][0])
                i_g, fl_g, fr_g, o_g, u_g = np.split(g, 5)
                c_tag = sig(i_g) * np.tanh(u_g) + sig(fl_g) * clt + sig(fr_g) * crt
                h_tag = sig(o_g) * np.tanh(c_tag)
                Stag[bi, t] = np.concatenate([h_tag, c_tag])
                tc[bi] += 1
                gw = (hl @ p['w_wt_l'] + hr @ p['w_wt_r'] +
                      h_tag @ p['w_wt_e'] + p['b_wt'][0])
                i_w, fl_w, fr_w, o_w, u_w = np.split(gw, 5)
                c_w = sig(i_w) * np.tanh(u_w) + sig(fl_w) * cl + sig(fr_w) * cr
                h_w = sig(o_w) * np.tanh(c_w)
                S[bi, t] = np.concatenate([h_w, c_w])
                qc[bi] -= 1
                Q[bi, qc[bi]] = t
    return S[:, T, :H]


# ----------------------------------- main -------------------------------------
if __name__ == "__main__":
    key = jax.random.PRNGKey(0)
    ks = jax.random.split(key, 16)
    s = 0.2
    params = {
        'w_leaf': jax.random.normal(ks[0], (WORD_DIM, 2 * H), jnp.float32) * s,
        'b_leaf': jax.random.normal(ks[1], (1, 2 * H), jnp.float32) * s,
        'w_tl':   jax.random.normal(ks[2], (DT, 2 * DT), jnp.float32) * s,
        'b_tl':   jax.random.normal(ks[3], (1, 2 * DT), jnp.float32) * s,
        'w_wt_l': jax.random.normal(ks[4], (H, 5 * H), jnp.float32) * s,
        'w_wt_r': jax.random.normal(ks[5], (H, 5 * H), jnp.float32) * s,
        'w_wt_e': jax.random.normal(ks[6], (DT, 5 * H), jnp.float32) * s,
        'b_wt':   jax.random.normal(ks[7], (1, 5 * H), jnp.float32) * s,
        'w_tt_l': jax.random.normal(ks[8], (DT, 5 * DT), jnp.float32) * s,
        'w_tt_r': jax.random.normal(ks[9], (DT, 5 * DT), jnp.float32) * s,
        'w_tt_x': jax.random.normal(ks[10], (DT, 5 * DT), jnp.float32) * s,
        'b_tt':   jax.random.normal(ks[11], (1, 5 * DT), jnp.float32) * s,
    }
    emb = jax.random.uniform(ks[12], (VOCAB, DT), jnp.float32,
                             minval=-0.005, maxval=0.005)
    emb = emb.at[0].set(0.0).at[WORD_TAG_VOCAB].set(0.0)   # matches nn.init.constant_
    params['emb'] = emb

    x = jax.random.normal(ks[13], (B, SENT_LEN, WORD_DIM), jnp.float32)
    sent_lens = [SENT_LEN, 6]
    x_len = jnp.array(sent_lens, dtype=jnp.int32)

    def make_actions(L):                       # left-branching parse: S S R (S R)*
        acts = [1, 1, 2] + [1, 2] * (L - 2)
        return acts + [0] * (T - len(acts))

    a = jnp.array([make_actions(L) for L in sent_lens], dtype=jnp.int32)
    a_len = jnp.array([2 * L - 1 for L in sent_lens], dtype=jnp.int32)
    word_tag = jax.random.randint(ks[14], (B, SENT_LEN), 0, WORD_TAG_VOCAB,
                                  dtype=jnp.int32)
    cons_tag = jax.random.randint(ks[15], (B, 2 * SENT_LEN - 1), 0, CONS_TAG_VOCAB,
                                  dtype=jnp.int32)

    out = encoder_forward(x, x_len, a, a_len, word_tag, cons_tag, params)
    out = jax.block_until_ready(out)

    ref = reference_forward(np.asarray(x), np.asarray(a), np.asarray(word_tag),
                            np.asarray(cons_tag),
                            {k: np.asarray(v) for k, v in params.items()})
    # tolerance allows for default-precision (bf16-pass) MXU matmuls vs f32 numpy
    np.testing.assert_allclose(np.asarray(out), ref, rtol=3e-2, atol=3e-2)
    print("KERNEL_OK")
</pallas_src>

<mosaic_0001>
module attributes {stable_mosaic.version = 11 : i64} {
  func.func @_leaf_kernel(%arg0: memref<16x32xf32, #tpu.memory_space<vmem>>, %arg1: memref<16x16xf32, #tpu.memory_space<vmem>>, %arg2: memref<32x64xf32, #tpu.memory_space<vmem>>, %arg3: memref<1x64xf32, #tpu.memory_space<vmem>>, %arg4: memref<16x32xf32, #tpu.memory_space<vmem>>, %arg5: memref<1x32xf32, #tpu.memory_space<vmem>>, %arg6: memref<16x64xf32, #tpu.memory_space<vmem>>, %arg7: memref<16x32xf32, #tpu.memory_space<vmem>>) attributes {dimension_semantics = [], scalar_prefetch = 0 : i64, scratch_operands = 0 : i64, tpu.core_type = #tpu.core_type<tc>} {
    %c0 = arith.constant 0 : index
    %c0_0 = arith.constant 0 : index
    %0 = vector.load %arg0[%c0, %c0_0] : memref<16x32xf32, #tpu.memory_space<vmem>>, vector<16x32xf32>
    %c0_1 = arith.constant 0 : index
    %c0_2 = arith.constant 0 : index
    %1 = vector.load %arg2[%c0_1, %c0_2] : memref<32x64xf32, #tpu.memory_space<vmem>>, vector<32x64xf32>
    %cst = arith.constant dense<0.000000e+00> : vector<16x64xf32>
    %2 = tpu.matmul %0, %1, %cst {dimension_numbers = #tpu.dot_dimension_numbers<[1], [0], [0], [1], [0, 0, 1, 1], [], []>} : vector<16x32xf32>, vector<32x64xf32>, vector<16x64xf32> -> vector<16x64xf32>
    %c0_3 = arith.constant 0 : index
    %c0_4 = arith.constant 0 : index
    %3 = vector.load %arg3[%c0_3, %c0_4] : memref<1x64xf32, #tpu.memory_space<vmem>>, vector<1x64xf32>
    %4 = vector.broadcast %3 : vector<1x64xf32> to vector<16x64xf32>
    %5 = arith.addf %2, %4 : vector<16x64xf32>
    %6 = math.tanh %5 : vector<16x64xf32>
    %c0_5 = arith.constant 0 : index
    %c0_6 = arith.constant 0 : index
    %7 = vector.load %arg6[%c0_5, %c0_6] : memref<16x64xf32, #tpu.memory_space<vmem>>, vector<16x64xf32>
    tpu.vector_store %arg6[%c0_5, %c0_6], %6 {strides = array<i32>} : memref<16x64xf32, #tpu.memory_space<vmem>>, vector<16x64xf32>,
    %c0_7 = arith.constant 0 : index
    %c0_8 = arith.constant 0 : index
    %8 = vector.load %arg1[%c0_7, %c0_8] : memref<16x16xf32, #tpu.memory_space<vmem>>, vector<16x16xf32>
    %c0_9 = arith.constant 0 : index
    %c0_10 = arith.constant 0 : index
    %9 = vector.load %arg4[%c0_9, %c0_10] : memref<16x32xf32, #tpu.memory_space<vmem>>, vector<16x32xf32>
    %cst_11 = arith.constant dense<0.000000e+00> : vector<16x32xf32>
    %10 = tpu.matmul %8, %9, %cst_11 {dimension_numbers = #tpu.dot_dimension_numbers<[1], [0], [0], [1], [0, 0, 1, 1], [], []>} : vector<16x16xf32>, vector<16x32xf32>, vector<16x32xf32> -> vector<16x32xf32>
    %c0_12 = arith.constant 0 : index
    %c0_13 = arith.constant 0 : index
    %11 = vector.load %arg5[%c0_12, %c0_13] : memref<1x32xf32, #tpu.memory_space<vmem>>, vector<1x32xf32>
    %12 = vector.broadcast %11 : vector<1x32xf32> to vector<16x32xf32>
    %13 = arith.addf %10, %12 : vector<16x32xf32>
    %14 = math.tanh %13 : vector<16x32xf32>
    %c0_14 = arith.constant 0 : index
    %c0_15 = arith.constant 0 : index
    %15 = vector.load %arg7[%c0_14, %c0_15] : memref<16x32xf32, #tpu.memory_space<vmem>>, vector<16x32xf32>
    tpu.vector_store %arg7[%c0_14, %c0_15], %14 {strides = array<i32>} : memref<16x32xf32, #tpu.memory_space<vmem>>, vector<16x32xf32>,
    return
  }
}

module attributes {stable_mosaic.version = 11 : i64} {
  func.func @_shift_reduce_kernel(%arg0: i32, %arg1: memref<2x15xi32, #tpu.memory_space<smem>>, %arg2: memref<1x9x1x64xf32, #tpu.memory_space<vmem>>, %arg3: memref<1x9x1x32xf32, #tpu.memory_space<vmem>>, %arg4: memref<1x15x1x16xf32, #tpu.memory_space<vmem>>, %arg5: memref<80x160xf32, #tpu.memory_space<vmem>>, %arg6: memref<1x160xf32, #tpu.memory_space<vmem>>, %arg7: memref<48x80xf32, #tpu.memory_space<vmem>>, %arg8: memref<1x80xf32, #tpu.memory_space<vmem>>, %arg9: memref<1x1x32xf32, #tpu.memory_space<vmem>>, %arg10: memref<16x1x64xf32, #tpu.memory_space<vmem>>, %arg11: memref<16x1x32xf32, #tpu.memory_space<vmem>>, %arg12: memref<10xi32, #tpu.memory_space<smem>>, %arg13: memref<3xi32, #tpu.memory_space<smem>>) attributes {dimension_semantics = [#tpu.dimension_semantics<parallel>], iteration_bounds = array<i64: 2>, scalar_prefetch = 1 : i64, scratch_operands = 4 : i64, tpu.core_type = #tpu.core_type<tc>, window_params = [{transform_indices = @transform_0, window_bounds = array<i64: 1, 9, 1, 64>}, {transform_indices = @transform_1, window_bounds = array<i64: 1, 9, 1, 32>}, {transform_indices = @transform_2, window_bounds = array<i64: 1, 15, 1, 16>}, {pipeline_mode = #tpu.pipeline_mode<synchronous>, transform_indices = @transform_3, window_bounds = array<i64: 80, 160>}, {pipeline_mode = #tpu.pipeline_mode<synchronous>, transform_indices = @transform_4, window_bounds = array<i64: 1, 160>}, {pipeline_mode = #tpu.pipeline_mode<synchronous>, transform_indices = @transform_5, window_bounds = array<i64: 48, 80>}, {pipeline_mode = #tpu.pipeline_mode<synchronous>, transform_indices = @transform_6, window_bounds = array<i64: 1, 80>}, {transform_indices = @transform_7, window_bounds = array<i64: 1, 1, 32>}]} {
    %cst = arith.constant 0.000000e+00 : f32
    %0 = vector.broadcast %cst : f32 to vector<16x1x64xf32>
    %c0 = arith.constant 0 : index
    %c0_0 = arith.constant 0 : index
    %c0_1 = arith.constant 0 : index
    %1 = vector.load %arg10[%c0, %c0_0, %c0_1] : memref<16x1x64xf32, #tpu.memory_space<vmem>>, vector<16x1x64xf32>
    tpu.vector_store %arg10[%c0, %c0_0, %c0_1], %0 {strides = array<i32>} : memref<16x1x64xf32, #tpu.memory_space<vmem>>, vector<16x1x64xf32>,
    %cst_2 = arith.constant 0.000000e+00 : f32
    %2 = vector.broadcast %cst_2 : f32 to vector<16x1x32xf32>
    %c0_3 = arith.constant 0 : index
    %c0_4 = arith.constant 0 : index
    %c0_5 = arith.constant 0 : index
    %3 = vector.load %arg11[%c0_3, %c0_4, %c0_5] : memref<16x1x32xf32, #tpu.memory_space<vmem>>, vector<16x1x32xf32>
    tpu.vector_store %arg11[%c0_3, %c0_4, %c0_5], %2 {strides = array<i32>} : memref<16x1x32xf32, #tpu.memory_space<vmem>>, vector<16x1x32xf32>,
    %c0_i32 = arith.constant 0 : i32
    %c0_6 = arith.constant 0 : index
    %4 = memref.load %arg12[%c0_6] : memref<10xi32, #tpu.memory_space<smem>>
    memref.store %c0_i32, %arg12[%c0_6] : memref<10xi32, #tpu.memory_space<smem>>
    %c0_i32_7 = arith.constant 0 : i32
    %c1 = arith.constant 1 : index
    %5 = memref.load %arg12[%c1] : memref<10xi32, #tpu.memory_space<smem>>
    memref.store %c0_i32_7, %arg12[%c1] : memref<10xi32, #tpu.memory_space<smem>>
    %c0_i32_8 = arith.constant 0 : i32
    %c2 = arith.constant 2 : index
    %6 = memref.load %arg12[%c2] : memref<10xi32, #tpu.memory_space<smem>>
    memref.store %c0_i32_8, %arg12[%c2] : memref<10xi32, #tpu.memory_space<smem>>
    %c0_i32_9 = arith.constant 0 : i32
    %c3 = arith.constant 3 : index
    %7 = memref.load %arg12[%c3] : memref<10xi32, #tpu.memory_space<smem>>
    memref.store %c0_i32_9, %arg12[%c3] : memref<10xi32, #tpu.memory_space<smem>>
    %c0_i32_10 = arith.constant 0 : i32
    %c4 = arith.constant 4 : index
    %8 = memref.load %arg12[%c4] : memref<10xi32, #tpu.memory_space<smem>>
    memref.store %c0_i32_10, %arg12[%c4] : memref<10xi32, #tpu.memory_space<smem>>
    %c0_i32_11 = arith.constant 0 : i32
    %c5 = arith.constant 5 : index
    %9 = memref.load %arg12[%c5] : memref<10xi32, #tpu.memory_space<smem>>
    memref.store %c0_i32_11, %arg12[%c5] : memref<10xi32, #tpu.memory_space<smem>>
    %c0_i32_12 = arith.constant 0 : i32
    %c6 = arith.constant 6 : index
    %10 = memref.load %arg12[%c6] : memref<10xi32, #tpu.memory_space<smem>>
    memref.store %c0_i32_12, %arg12[%c6] : memref<10xi32, #tpu.memory_space<smem>>
    %c0_i32_13 = arith.constant 0 : i32
    %c7 = arith.constant 7 : index
    %11 = memref.load %arg12[%c7] : memref<10xi32, #tpu.memory_space<smem>>
    memref.store %c0_i32_13, %arg12[%c7] : memref<10xi32, #tpu.memory_space<smem>>
    %c0_i32_14 = arith.constant 0 : i32
    %c8 = arith.constant 8 : index
    %12 = memref.load %arg12[%c8] : memref<10xi32, #tpu.memory_space<smem>>
    memref.store %c0_i32_14, %arg12[%c8] : memref<10xi32, #tpu.memory_space<smem>>
    %c0_i32_15 = arith.constant 0 : i32
    %c9 = arith.constant 9 : index
    %13 = memref.load %arg12[%c9] : memref<10xi32, #tpu.memory_space<smem>>
    memref.store %c0_i32_15, %arg12[%c9] : memref<10xi32, #tpu.memory_space<smem>>
    %c0_i32_16 = arith.constant 0 : i32
    %c0_17 = arith.constant 0 : index
    %14 = memref.load %arg13[%c0_17] : memref<3xi32, #tpu.memory_space<smem>>
    memref.store %c0_i32_16, %arg13[%c0_17] : memref<3xi32, #tpu.memory_space<smem>>
    %c1_i32 = arith.constant 1 : i32
    %c1_18 = arith.constant 1 : index
    %15 = memref.load %arg13[%c1_18] : memref<3xi32, #tpu.memory_space<smem>>
    memref.store %c1_i32, %arg13[%c1_18] : memref<3xi32, #tpu.memory_space<smem>>
    %c0_i32_19 = arith.constant 0 : i32
    %c2_20 = arith.constant 2 : index
    %16 = memref.load %arg13[%c2_20] : memref<3xi32, #tpu.memory_space<smem>>
    memref.store %c0_i32_19, %arg13[%c2_20] : memref<3xi32, #tpu.memory_space<smem>>
    %c0_21 = arith.constant 0 : index
    %c0_22 = arith.constant 0 : index
    %c0_23 = arith.constant 0 : index
    %c0_24 = arith.constant 0 : index
    %17 = vector.load %arg2[%c0_21, %c0_22, %c0_23, %c0_24] : memref<1x9x1x64xf32, #tpu.memory_space<vmem>>, vector<1x1x1x64xf32>
    %18 = vector.shape_cast %17 : vector<1x1x1x64xf32> to vector<1x64xf32>
    %c0_25 = arith.constant 0 : index
    %c0_26 = arith.constant 0 : index
    %c0_27 = arith.constant 0 : index
    %19 = vector.load %arg10[%c0_25, %c0_26, %c0_27] : memref<16x1x64xf32, #tpu.memory_space<vmem>>, vector<1x1x64xf32>
    %20 = vector.shape_cast %19 : vector<1x1x64xf32> to vector<1x64xf32>
    %21 = vector.shape_cast %18 : vector<1x64xf32> to vector<1x1x64xf32>
    tpu.vector_store %arg10[%c0_25, %c0_26, %c0_27], %21 {strides = array<i32>} : memref<16x1x64xf32, #tpu.memory_space<vmem>>, vector<1x1x64xf32>,
    %c1_i32_28 = arith.constant 1 : i32
    %c15_i32 = arith.constant 15 : i32
    %22 = arith.addi %c1_i32_28, %c15_i32 : i32
    %c1_i32_29 = arith.constant 1 : i32
    scf.for %arg14 = %c1_i32_28 to %22 step %c1_i32_29  : i32 {
      %c1_i32_36 = arith.constant 1 : i32
      %29 = arith.subi %arg14, %c1_i32_36 : i32
      %30 = arith.index_cast %arg0 : i32 to index
      %31 = arith.index_cast %29 : i32 to index
      %32 = memref.load %arg1[%30, %31] : memref<2x15xi32, #tpu.memory_space<smem>>
      %c1_i32_37 = arith.constant 1 : i32
      %33 = arith.cmpi eq, %32, %c1_i32_37 : i32
      %c2_i32 = arith.constant 2 : i32
      %34 = arith.cmpi eq, %32, %c2_i32 : i32
      %35 = arith.ori %33, %34 : i1
      %true = arith.constant true
      %36 = arith.xori %35, %true : i1
      %37 = arith.extui %36 : i1 to i32
      %c0_i32_38 = arith.constant 0 : i32
      %38 = arith.cmpi ne, %37, %c0_i32_38 : i32
      scf.if %38 {
        %c1_i32_41 = arith.constant 1 : i32
        %43 = arith.subi %arg14, %c1_i32_41 : i32
        %44 = arith.index_cast %43 : i32 to index
        %c0_42 = arith.constant 0 : index
        %c0_43 = arith.constant 0 : index
        %45 = vector.load %arg10[%44, %c0_42, %c0_43] : memref<16x1x64xf32, #tpu.memory_space<vmem>>, vector<1x1x64xf32>
        %46 = vector.shape_cast %45 : vector<1x1x64xf32> to vector<1x64xf32>
        %47 = arith.index_cast %arg14 : i32 to index
        %c0_44 = arith.constant 0 : index
        %c0_45 = arith.constant 0 : index
        %48 = vector.load %arg10[%47, %c0_44, %c0_45] : memref<16x1x64xf32, #tpu.memory_space<vmem>>, vector<1x1x64xf32>
        %49 = vector.shape_cast %48 : vector<1x1x64xf32> to vector<1x64xf32>
        %50 = vector.shape_cast %46 : vector<1x64xf32> to vector<1x1x64xf32>
        tpu.vector_store %arg10[%47, %c0_44, %c0_45], %50 {strides = array<i32>} : memref<16x1x64xf32, #tpu.memory_space<vmem>>, vector<1x1x64xf32>,
      } else {
      }
      %39 = arith.extui %33 : i1 to i32
      %c0_i32_39 = arith.constant 0 : i32
      %40 = arith.cmpi ne, %39, %c0_i32_39 : i32
      scf.if %40 {
        %c0_41 = arith.constant 0 : index
        %43 = memref.load %arg13[%c0_41] : memref<3xi32, #tpu.memory_space<smem>>
        %c0_42 = arith.constant 0 : index
        %44 = arith.index_cast %43 : i32 to index
        %c0_43 = arith.constant 0 : index
        %c0_44 = arith.constant 0 : index
        %45 = vector.load %arg2[%c0_42, %44, %c0_43, %c0_44] : memref<1x9x1x64xf32, #tpu.memory_space<vmem>>, vector<1x1x1x64xf32>
        %46 = vector.shape_cast %45 : vector<1x1x1x64xf32> to vector<1x64xf32>
        %47 = arith.index_cast %arg14 : i32 to index
        %c0_45 = arith.constant 0 : index
        %c0_46 = arith.constant 0 : index
        %48 = vector.load %arg10[%47, %c0_45, %c0_46] : memref<16x1x64xf32, #tpu.memory_space<vmem>>, vector<1x1x64xf32>
        %49 = vector.shape_cast %48 : vector<1x1x64xf32> to vector<1x64xf32>
        %50 = vector.shape_cast %46 : vector<1x64xf32> to vector<1x1x64xf32>
        tpu.vector_store %arg10[%47, %c0_45, %c0_46], %50 {strides = array<i32>} : memref<16x1x64xf32, #tpu.memory_space<vmem>>, vector<1x1x64xf32>,
        %c0_47 = arith.constant 0 : index
        %51 = arith.index_cast %43 : i32 to index
        %c0_48 = arith.constant 0 : index
        %c0_49 = arith.constant 0 : index
        %52 = vector.load %arg3[%c0_47, %51, %c0_48, %c0_49] : memref<1x9x1x32xf32, #tpu.memory_space<vmem>>, vector<1x1x1x32xf32>
        %53 = vector.shape_cast %52 : vector<1x1x1x32xf32> to vector<1x32xf32>
        %54 = arith.index_cast %arg14 : i32 to index
        %c0_50 = arith.constant 0 : index
        %c0_51 = arith.constant 0 : index
        %55 = vector.load %arg11[%54, %c0_50, %c0_51] : memref<16x1x32xf32, #tpu.memory_space<vmem>>, vector<1x1x32xf32>
        %56 = vector.shape_cast %55 : vector<1x1x32xf32> to vector<1x32xf32>
        %57 = vector.shape_cast %53 : vector<1x32xf32> to vector<1x1x32xf32>
        tpu.vector_store %arg11[%54, %c0_50, %c0_51], %57 {strides = array<i32>} : memref<16x1x32xf32, #tpu.memory_space<vmem>>, vector<1x1x32xf32>,
        %c1_i32_52 = arith.constant 1 : i32
        %58 = arith.addi %43, %c1_i32_52 : i32
        %c0_53 = arith.constant 0 : index
        %59 = memref.load %arg13[%c0_53] : memref<3xi32, #tpu.memory_space<smem>>
        memref.store %58, %arg13[%c0_53] : memref<3xi32, #tpu.memory_space<smem>>
        %c1_54 = arith.constant 1 : index
        %60 = memref.load %arg13[%c1_54] : memref<3xi32, #tpu.memory_space<smem>>
        %c1_i32_55 = arith.constant 1 : i32
        %61 = arith.addi %60, %c1_i32_55 : i32
        %c1_56 = arith.constant 1 : index
        %62 = memref.load %arg13[%c1_56] : memref<3xi32, #tpu.memory_space<smem>>
        memref.store %61, %arg13[%c1_56] : memref<3xi32, #tpu.memory_space<smem>>
        %63 = arith.index_cast %61 : i32 to index
        %64 = memref.load %arg12[%63] : memref<10xi32, #tpu.memory_space<smem>>
        memref.store %arg14, %arg12[%63] : memref<10xi32, #tpu.memory_space<smem>>
      } else {
      }
      %41 = arith.extui %34 : i1 to i32
      %c0_i32_40 = arith.constant 0 : i32
      %42 = arith.cmpi ne, %41, %c0_i32_40 : i32
      scf.if %42 {
        %c1_41 = arith.constant 1 : index
        %43 = memref.load %arg13[%c1_41] : memref<3xi32, #tpu.memory_space<smem>>
        %c1_i32_42 = arith.constant 1 : i32
        %44 = arith.subi %43, %c1_i32_42 : i32
        %45 = arith.index_cast %44 : i32 to index
        %46 = memref.load %arg12[%45] : memref<10xi32, #tpu.memory_space<smem>>
        %47 = arith.index_cast %43 : i32 to index
        %48 = memref.load %arg12[%47] : memref<10xi32, #tpu.memory_space<smem>>
        %49 = arith.index_cast %46 : i32 to index
        %c0_43 = arith.constant 0 : index
        %c0_44 = arith.constant 0 : index
        %50 = vector.load %arg10[%49, %c0_43, %c0_44] : memref<16x1x64xf32, #tpu.memory_space<vmem>>, vector<1x1x64xf32>
        %51 = vector.shape_cast %50 : vector<1x1x64xf32> to vector<1x64xf32>
        %52 = arith.index_cast %48 : i32 to index
        %c0_45 = arith.constant 0 : index
        %c0_46 = arith.constant 0 : index
        %53 = vector.load %arg10[%52, %c0_45, %c0_46] : memref<16x1x64xf32, #tpu.memory_space<vmem>>, vector<1x1x64xf32>
        %54 = vector.shape_cast %53 : vector<1x1x64xf32> to vector<1x64xf32>
        %55 = arith.index_cast %46 : i32 to index
        %c0_47 = arith.constant 0 : index
        %c0_48 = arith.constant 0 : index
        %56 = vector.load %arg11[%55, %c0_47, %c0_48] : memref<16x1x32xf32, #tpu.memory_space<vmem>>, vector<1x1x32xf32>
        %57 = vector.shape_cast %56 : vector<1x1x32xf32> to vector<1x32xf32>
        %58 = arith.index_cast %48 : i32 to index
        %c0_49 = arith.constant 0 : index
        %c0_50 = arith.constant 0 : index
        %59 = vector.load %arg11[%58, %c0_49, %c0_50] : memref<16x1x32xf32, #tpu.memory_space<vmem>>, vector<1x1x32xf32>
        %60 = vector.shape_cast %59 : vector<1x1x32xf32> to vector<1x32xf32>
        %c2_51 = arith.constant 2 : index
        %61 = memref.load %arg13[%c2_51] : memref<3xi32, #tpu.memory_space<smem>>
        %c0_52 = arith.constant 0 : index
        %62 = arith.index_cast %61 : i32 to index
        %c0_53 = arith.constant 0 : index
        %c0_54 = arith.constant 0 : index
        %63 = vector.load %arg4[%c0_52, %62, %c0_53, %c0_54] : memref<1x15x1x16xf32, #tpu.memory_space<vmem>>, vector<1x1x1x16xf32>
        %64 = vector.shape_cast %63 : vector<1x1x1x16xf32> to vector<1x16xf32>
        %65 = vector.extract_strided_slice %57 {offsets = [0, 0], sizes = [1, 16], strides = [1, 1]} : vector<1x32xf32> to vector<1x16xf32>
        %66 = vector.extract_strided_slice %60 {offsets = [0, 0], sizes = [1, 16], strides = [1, 1]} : vector<1x32xf32> to vector<1x16xf32>
        %67 = tpu.concatenate %65, %66, %64 in 1 : vector<1x16xf32>, vector<1x16xf32>, vector<1x16xf32> -> vector<1x48xf32>
        %c0_55 = arith.constant 0 : index
        %c0_56 = arith.constant 0 : index
        %68 = vector.load %arg7[%c0_55, %c0_56] : memref<48x80xf32, #tpu.memory_space<vmem>>, vector<48x80xf32>
        %cst_57 = arith.constant dense<0.000000e+00> : vector<1x80xf32>
        %69 = tpu.matmul %67, %68, %cst_57 {dimension_numbers = #tpu.dot_dimension_numbers<[1], [0], [0], [1], [0, 0, 1, 1], [], []>} : vector<1x48xf32>, vector<48x80xf32>, vector<1x80xf32> -> vector<1x80xf32>
        %c0_58 = arith.constant 0 : index
        %c0_59 = arith.constant 0 : index
        %70 = vector.load %arg8[%c0_58, %c0_59] : memref<1x80xf32, #tpu.memory_space<vmem>>, vector<1x80xf32>
        %71 = arith.addf %69, %70 : vector<1x80xf32>
        %72 = vector.extract_strided_slice %71 {offsets = [0, 0], sizes = [1, 16], strides = [1, 1]} : vector<1x80xf32> to vector<1x16xf32>
        %73 = arith.negf %72 : vector<1x16xf32>
        %74 = math.exp %73 : vector<1x16xf32>
        %cst_60 = arith.constant 1.000000e+00 : f32
        %75 = vector.broadcast %cst_60 : f32 to vector<1x16xf32>
        %76 = arith.addf %75, %74 : vector<1x16xf32>
        %77 = arith.divf %75, %76 : vector<1x16xf32>
        %78 = vector.extract_strided_slice %71 {offsets = [0, 16], sizes = [1, 16], strides = [1, 1]} : vector<1x80xf32> to vector<1x16xf32>
        %79 = arith.negf %78 : vector<1x16xf32>
        %80 = math.exp %79 : vector<1x16xf32>
        %cst_61 = arith.constant 1.000000e+00 : f32
        %81 = vector.broadcast %cst_61 : f32 to vector<1x16xf32>
        %82 = arith.addf %81, %80 : vector<1x16xf32>
        %83 = arith.divf %81, %82 : vector<1x16xf32>
        %84 = vector.extract_strided_slice %71 {offsets = [0, 32], sizes = [1, 16], strides = [1, 1]} : vector<1x80xf32> to vector<1x16xf32>
        %85 = arith.negf %84 : vector<1x16xf32>
        %86 = math.exp %85 : vector<1x16xf32>
        %cst_62 = arith.constant 1.000000e+00 : f32
        %87 = vector.broadcast %cst_62 : f32 to vector<1x16xf32>
        %88 = arith.addf %87, %86 : vector<1x16xf32>
        %89 = arith.divf %87, %88 : vector<1x16xf32>
        %90 = vector.extract_strided_slice %71 {offsets = [0, 48], sizes = [1, 16], strides = [1, 1]} : vector<1x80xf32> to vector<1x16xf32>
        %91 = arith.negf %90 : vector<1x16xf32>
        %92 = math.exp %91 : vector<1x16xf32>
        %cst_63 = arith.constant 1.000000e+00 : f32
        %93 = vector.broadcast %cst_63 : f32 to vector<1x16xf32>
        %94 = arith.addf %93, %92 : vector<1x16xf32>
        %95 = arith.divf %93, %94 : vector<1x16xf32>
        %96 = vector.extract_strided_slice %71 {offsets = [0, 64], sizes = [1, 16], strides = [1, 1]} : vector<1x80xf32> to vector<1x16xf32>
        %97 = math.tanh %96 : vector<1x16xf32>
        %98 = arith.mulf %77, %97 : vector<1x16xf32>
        %99 = vector.extract_strided_slice %57 {offsets = [0, 16], sizes = [1, 16], strides = [1, 1]} : vector<1x32xf32> to vector<1x16xf32>
        %100 = arith.mulf %83, %99 : vector<1x16xf32>
        %101 = arith.addf %98, %100 : vector<1x16xf32>
        %102 = vector.extract_strided_slice %60 {offsets = [0, 16], sizes = [1, 16], strides = [1, 1]} : vector<1x32xf32> to vector<1x16xf32>
        %103 = arith.mulf %89, %102 : vector<1x16xf32>
        %104 = arith.addf %101, %103 : vector<1x16xf32>
        %105 = math.tanh %104 : vector<1x16xf32>
        %106 = arith.mulf %95, %105 : vector<1x16xf32>
        %107 = tpu.concatenate %106, %104 in 1 : vector<1x16xf32>, vector<1x16xf32> -> vector<1x32xf32>
        %108 = arith.index_cast %arg14 : i32 to index
        %c0_64 = arith.constant 0 : index
        %c0_65 = arith.constant 0 : index
        %109 = vector.load %arg11[%108, %c0_64, %c0_65] : memref<16x1x32xf32, #tpu.memory_space<vmem>>, vector<1x1x32xf32>
        %110 = vector.shape_cast %109 : vector<1x1x32xf32> to vector<1x32xf32>
        %111 = vector.shape_cast %107 : vector<1x32xf32> to vector<1x1x32xf32>
        tpu.vector_store %arg11[%108, %c0_64, %c0_65], %111 {strides = array<i32>} : memref<16x1x32xf32, #tpu.memory_space<vmem>>, vector<1x1x32xf32>,
        %c1_i32_66 = arith.constant 1 : i32
        %112 = arith.addi %61, %c1_i32_66 : i32
        %c2_67 = arith.constant 2 : index
        %113 = memref.load %arg13[%c2_67] : memref<3xi32, #tpu.memory_space<smem>>
        memref.store %112, %arg13[%c2_67] : memref<3xi32, #tpu.memory_space<smem>>
        %114 = vector.extract_strided_slice %51 {offsets = [0, 0], sizes = [1, 32], strides = [1, 1]} : vector<1x64xf32> to vector<1x32xf32>
        %115 = vector.extract_strided_slice %54 {offsets = [0, 0], sizes = [1, 32], strides = [1, 1]} : vector<1x64xf32> to vector<1x32xf32>
        %116 = tpu.concatenate %114, %115, %106 in 1 : vector<1x32xf32>, vector<1x32xf32>, vector<1x16xf32> -> vector<1x80xf32>
        %c0_68 = arith.constant 0 : index
        %c0_69 = arith.constant 0 : index
        %117 = vector.load %arg5[%c0_68, %c0_69] : memref<80x160xf32, #tpu.memory_space<vmem>>, vector<80x160xf32>
        %cst_70 = arith.constant dense<0.000000e+00> : vector<1x160xf32>
        %118 = tpu.matmul %116, %117, %cst_70 {dimension_numbers = #tpu.dot_dimension_numbers<[1], [0], [0], [1], [0, 0, 1, 1], [], []>} : vector<1x80xf32>, vector<80x160xf32>, vector<1x160xf32> -> vector<1x160xf32>
        %c0_71 = arith.constant 0 : index
        %c0_72 = arith.constant 0 : index
        %119 = vector.load %arg6[%c0_71, %c0_72] : memref<1x160xf32, #tpu.memory_space<vmem>>, vector<1x160xf32>
        %120 = arith.addf %118, %119 : vector<1x160xf32>
        %121 = vector.extract_strided_slice %120 {offsets = [0, 0], sizes = [1, 32], strides = [1, 1]} : vector<1x160xf32> to vector<1x32xf32>
        %122 = arith.negf %121 : vector<1x32xf32>
        %123 = math.exp %122 : vector<1x32xf32>
        %cst_73 = arith.constant 1.000000e+00 : f32
        %124 = vector.broadcast %cst_73 : f32 to vector<1x32xf32>
        %125 = arith.addf %124, %123 : vector<1x32xf32>
        %126 = arith.divf %124, %125 : vector<1x32xf32>
        %127 = vector.extract_strided_slice %120 {offsets = [0, 32], sizes = [1, 32], strides = [1, 1]} : vector<1x160xf32> to vector<1x32xf32>
        %128 = arith.negf %127 : vector<1x32xf32>
        %129 = math.exp %128 : vector<1x32xf32>
        %cst_74 = arith.constant 1.000000e+00 : f32
        %130 = vector.broadcast %cst_74 : f32 to vector<1x32xf32>
        %131 = arith.addf %130, %129 : vector<1x32xf32>
        %132 = arith.divf %130, %131 : vector<1x32xf32>
        %133 = vector.extract_strided_slice %120 {offsets = [0, 64], sizes = [1, 32], strides = [1, 1]} : vector<1x160xf32> to vector<1x32xf32>
        %134 = arith.negf %133 : vector<1x32xf32>
        %135 = math.exp %134 : vector<1x32xf32>
        %cst_75 = arith.constant 1.000000e+00 : f32
        %136 = vector.broadcast %cst_75 : f32 to vector<1x32xf32>
        %137 = arith.addf %136, %135 : vector<1x32xf32>
        %138 = arith.divf %136, %137 : vector<1x32xf32>
        %139 = vector.extract_strided_slice %120 {offsets = [0, 96], sizes = [1, 32], strides = [1, 1]} : vector<1x160xf32> to vector<1x32xf32>
        %140 = arith.negf %139 : vector<1x32xf32>
        %141 = math.exp %140 : vector<1x32xf32>
        %cst_76 = arith.constant 1.000000e+00 : f32
        %142 = vector.broadcast %cst_76 : f32 to vector<1x32xf32>
        %143 = arith.addf %142, %141 : vector<1x32xf32>
        %144 = arith.divf %142, %143 : vector<1x32xf32>
        %145 = vector.extract_strided_slice %120 {offsets = [0, 128], sizes = [1, 32], strides = [1, 1]} : vector<1x160xf32> to vector<1x32xf32>
        %146 = math.tanh %145 : vector<1x32xf32>
        %147 = arith.mulf %126, %146 : vector<1x32xf32>
        %148 = vector.extract_strided_slice %51 {offsets = [0, 32], sizes = [1, 32], strides = [1, 1]} : vector<1x64xf32> to vector<1x32xf32>
        %149 = arith.mulf %132, %148 : vector<1x32xf32>
        %150 = arith.addf %147, %149 : vector<1x32xf32>
        %151 = vector.extract_strided_slice %54 {offsets = [0, 32], sizes = [1, 32], strides = [1, 1]} : vector<1x64xf32> to vector<1x32xf32>
        %152 = arith.mulf %138, %151 : vector<1x32xf32>
        %153 = arith.addf %150, %152 : vector<1x32xf32>
        %154 = math.tanh %153 : vector<1x32xf32>
        %155 = arith.mulf %144, %154 : vector<1x32xf32>
        %156 = tpu.concatenate %155, %153 in 1 : vector<1x32xf32>, vector<1x32xf32> -> vector<1x64xf32>
        %157 = arith.index_cast %arg14 : i32 to index
        %c0_77 = arith.constant 0 : index
        %c0_78 = arith.constant 0 : index
        %158 = vector.load %arg10[%157, %c0_77, %c0_78] : memref<16x1x64xf32, #tpu.memory_space<vmem>>, vector<1x1x64xf32>
        %159 = vector.shape_cast %158 : vector<1x1x64xf32> to vector<1x64xf32>
        %160 = vector.shape_cast %156 : vector<1x64xf32> to vector<1x1x64xf32>
        tpu.vector_store %arg10[%157, %c0_77, %c0_78], %160 {strides = array<i32>} : memref<16x1x64xf32, #tpu.memory_space<vmem>>, vector<1x1x64xf32>,
        %c1_i32_79 = arith.constant 1 : i32
        %161 = arith.subi %43, %c1_i32_79 : i32
        %c1_80 = arith.constant 1 : index
        %162 = memref.load %arg13[%c1_80] : memref<3xi32, #tpu.memory_space<smem>>
        memref.store %161, %arg13[%c1_80] : memref<3xi32, #tpu.memory_space<smem>>
        %163 = arith.index_cast %161 : i32 to index
        %164 = memref.load %arg12[%163] : memref<10xi32, #tpu.memory_space<smem>>
        memref.store %arg14, %arg12[%163] : memref<10xi32, #tpu.memory_space<smem>>
      } else {
      }
    }
    %c15_i32_30 = arith.constant 15 : i32
    %c15 = arith.constant 15 : index
    %c0_31 = arith.constant 0 : index
    %c0_32 = arith.constant 0 : index
    %23 = vector.load %arg10[%c15, %c0_31, %c0_32] : memref<16x1x64xf32, #tpu.memory_space<vmem>>, vector<1x1x64xf32>
    %24 = vector.shape_cast %23 : vector<1x1x64xf32> to vector<1x64xf32>
    %25 = vector.extract_strided_slice %24 {offsets = [0, 0], sizes = [1, 32], strides = [1, 1]} : vector<1x64xf32> to vector<1x32xf32>
    %c0_33 = arith.constant 0 : index
    %c0_34 = arith.constant 0 : index
    %c0_35 = arith.constant 0 : index
    %26 = vector.load %arg9[%c0_33, %c0_34, %c0_35] : memref<1x1x32xf32, #tpu.memory_space<vmem>>, vector<1x1x32xf32>
    %27 = vector.shape_cast %26 : vector<1x1x32xf32> to vector<1x32xf32>
    %28 = vector.shape_cast %25 : vector<1x32xf32> to vector<1x1x32xf32>
    tpu.vector_store %arg9[%c0_33, %c0_34, %c0_35], %28 {strides = array<i32>} : memref<1x1x32xf32, #tpu.memory_space<vmem>>, vector<1x1x32xf32>,
    return
  }
  func.func @transform_0(%arg0: i32, %arg1: memref<2x15xi32, #tpu.memory_space<smem>>) -> (i32, i32, i32, i32) {
    %c0_i32 = arith.constant 0 : i32
    %c0_i32_0 = arith.constant 0 : i32
    %c0_i32_1 = arith.constant 0 : i32
    %c0_i32_2 = arith.constant 0 : i32
    return %arg0, %c0_i32, %c0_i32_0, %c0_i32_1 : i32, i32, i32, i32
  }
  func.func @transform_1(%arg0: i32, %arg1: memref<2x15xi32, #tpu.memory_space<smem>>) -> (i32, i32, i32, i32) {
    %c0_i32 = arith.constant 0 : i32
    %c0_i32_0 = arith.constant 0 : i32
    %c0_i32_1 = arith.constant 0 : i32
    %c0_i32_2 = arith.constant 0 : i32
    return %arg0, %c0_i32, %c0_i32_0, %c0_i32_1 : i32, i32, i32, i32
  }
  func.func @transform_2(%arg0: i32, %arg1: memref<2x15xi32, #tpu.memory_space<smem>>) -> (i32, i32, i32, i32) {
    %c0_i32 = arith.constant 0 : i32
    %c0_i32_0 = arith.constant 0 : i32
    %c0_i32_1 = arith.constant 0 : i32
    %c0_i32_2 = arith.constant 0 : i32
    return %arg0, %c0_i32, %c0_i32_0, %c0_i32_1 : i32, i32, i32, i32
  }
  func.func @transform_3(%arg0: i32, %arg1: memref<2x15xi32, #tpu.memory_space<smem>>) -> (i32, i32) {
    %c0_i32 = arith.constant 0 : i32
    %c0_i32_0 = arith.constant 0 : i32
    %c0_i32_1 = arith.constant 0 : i32
    return %c0_i32, %c0_i32_0 : i32, i32
  }
  func.func @transform_4(%arg0: i32, %arg1: memref<2x15xi32, #tpu.memory_space<smem>>) -> (i32, i32) {
    %c0_i32 = arith.constant 0 : i32
    %c0_i32_0 = arith.constant 0 : i32
    %c0_i32_1 = arith.constant 0 : i32
    return %c0_i32, %c0_i32_0 : i32, i32
  }
  func.func @transform_5(%arg0: i32, %arg1: memref<2x15xi32, #tpu.memory_space<smem>>) -> (i32, i32) {
    %c0_i32 = arith.constant 0 : i32
    %c0_i32_0 = arith.constant 0 : i32
    %c0_i32_1 = arith.constant 0 : i32
    return %c0_i32, %c0_i32_0 : i32, i32
  }
  func.func @transform_6(%arg0: i32, %arg1: memref<2x15xi32, #tpu.memory_space<smem>>) -> (i32, i32) {
    %c0_i32 = arith.constant 0 : i32
    %c0_i32_0 = arith.constant 0 : i32
    %c0_i32_1 = arith.constant 0 : i32
    return %c0_i32, %c0_i32_0 : i32, i32
  }
  func.func @transform_7(%arg0: i32, %arg1: memref<2x15xi32, #tpu.memory_space<smem>>) -> (i32, i32, i32) {
    %c0_i32 = arith.constant 0 : i32
    %c0_i32_0 = arith.constant 0 : i32
    %c0_i32_1 = arith.constant 0 : i32
    return %arg0, %c0_i32, %c0_i32_0 : i32, i32, i32
  }
}

</mosaic_0001>

<llo_original>
// kernel: encoder_forward.2
$region0: #{encoder_forward.2}
  #allocation0 [shape = 'u32[]', space=smem, size = 0x4, offset = 0x4, fixed_abs, tag = 'smem constant byte address 0x4 - core index']
  #allocation1 [shape = 'u32[72,128]{1,0:T(1,128)}', space=vmem, size = 0x9000, scoped, tag = 'internal scratch']
  %s0 = inlined_call_operand.vmem [shape: f32[16,32], index: 0, kind: input, shape index: {}]
  %s1 = inlined_call_operand.vmem [shape: f32[16,16], index: 1, kind: input, shape index: {}]
  %s2 = inlined_call_operand.vmem [shape: f32[32,64], index: 2, kind: input, shape index: {}]
  %s3 = inlined_call_operand.vmem [shape: f32[1,64], index: 3, kind: input, shape index: {}]
  %s4 = inlined_call_operand.vmem [shape: f32[16,32], index: 4, kind: input, shape index: {}]
  %s5 = inlined_call_operand.vmem [shape: f32[1,32], index: 5, kind: input, shape index: {}]
  %s6 = inlined_call_operand.vmem [shape: f32[16,64], index: 6, kind: output, shape index: {0}]
  %s7 = inlined_call_operand.vmem [shape: f32[16,32], index: 7, kind: output, shape index: {1}]
  %8 = xla_tuple %s6, %s7
  %s9 = sld [smem:[#allocation0]]
  $region42: #{encoder_forward.2} parent=0
    _
  %s11 = ssub.s32 1, %s9
  %s12 = scalar_select 0, %s11, %s9
  // Predicated region
  $region2: #{encoder_forward.2} parent=0 // pred_check
    _
  $region3: #{encoder_forward.2} parent=0 // pred_check_branch
    %14 = sbr.rel (0) target = $region5
  $region4: #{encoder_forward.2} parent=0 // pred_region
    _
  $region5: #{encoder_forward.2} parent=0 // pred_fallthru
    _
  // Predicated region
  $region6: #{encoder_forward.2} parent=0 // pred_check
    _
  $region7: #{encoder_forward.2} parent=0 // pred_check_branch
    %16 = sbr.rel (0) target = $region9
  $region8: #{encoder_forward.2} parent=0 // pred_region
    _
  $region9: #{encoder_forward.2} parent=0 // pred_fallthru
    _
  // Predicated region
  $region10: #{encoder_forward.2} parent=0 // pred_check
    _
  $region11: #{encoder_forward.2} parent=0 // pred_check_branch
    %18 = sbr.rel (0) target = $region13
  $region12: #{encoder_forward.2} parent=0 // pred_region
    _
  $region13: #{encoder_forward.2} parent=0 // pred_fallthru
    _
  // Predicated region
  $region14: #{encoder_forward.2} parent=0 // pred_check
    _
  $region15: #{encoder_forward.2} parent=0 // pred_check_branch
    %20 = sbr.rel (0) target = $region17
  $region16: #{encoder_forward.2} parent=0 // pred_region
    _
  $region17: #{encoder_forward.2} parent=0 // pred_fallthru
    _
  // Predicated region
  $region18: #{encoder_forward.2} parent=0 // pred_check
    _
  $region19: #{encoder_forward.2} parent=0 // pred_check_branch
    %22 = sbr.rel (0) target = $region21
  $region20: #{encoder_forward.2} parent=0 // pred_region
    _
  $region21: #{encoder_forward.2} parent=0 // pred_fallthru
    _
  // Predicated region
  $region22: #{encoder_forward.2} parent=0 // pred_check
    _
  $region23: #{encoder_forward.2} parent=0 // pred_check_branch
    %24 = sbr.rel (0) target = $region25
  $region24: #{encoder_forward.2} parent=0 // pred_region
    _
  $region25: #{encoder_forward.2} parent=0 // pred_fallthru
    _
  %v25 = vld [vmem:[%s0] sm:$0xff]
  %v26 = vld [vmem:[%s0 + $0x8] sm:$0xff]
  %v27 = vld [vmem:[%s2] sm:$0xff]
  %v28 = vld [vmem:[%s2 + $0x8] sm:$0xff]
  %v29 = vld [vmem:[%s2 + $0x10] sm:$0xff]
  %v30 = vld [vmem:[%s2 + $0x18] sm:$0xff]
  %v31 = vld [vmem:[%s3] sm:$0x1]
  %v33 = vperm.slane %v31, 0
  %vm35 = vcmask 261120
  %v37 = vsel %vm35, %v25, 0
  %v40 = vsel %vm35, %v26, 0
  %42 = vmatpush.msra.mxu0 0.0
  %43 = vmatpush.msra.mxu0 0.0
  %44 = vmatpush.msra.mxu0 0.0
  %45 = vmatpush.msra.mxu0 0.0
  %46 = vmatpush.msra.mxu0 0.0
  %47 = vmatpush.msra.mxu0 0.0
  %48 = vmatpush.msra.mxu0 0.0
  %49 = vmatpush.msra.mxu0 0.0
  %50 = vmatpush.msra.mxu0 0.0
  %51 = vmatpush.msra.mxu0 0.0
  %52 = vmatpush.msra.mxu0 0.0
  %53 = vmatpush.msra.mxu0 0.0
  %54 = vmatpush.msra.mxu0 %v30
  %55 = vmatpush.msra.mxu0 %v29
  %56 = vmatpush.msra.mxu0 %v28
  %57 = vmatpush.msra.mxu0 %v27
  %58 = vmatmul.f32.gmra.mxu0 %v37
  %v59 = vpop.f32.mrf.mxu0
  %v60 = vadd.f32 %v33, %v59
  %61 = vmatmul.f32.gmra.mxu0 %v40
  %v62 = vpop.f32.mrf.mxu0
  %v63 = vadd.f32 %v33, %v62
  %64 = vdwg.mxu0
  %v65 = vtanh.pop %v60
  %v66 = vtanh.pop %v63
  %vm67 = vcmask 523264
  %68 = vst.msk [vmem:[%s6] sm:$0xff] %vm67, %v65
  %69 = vst.msk [vmem:[%s6 + $0x8] sm:$0xff] %vm67, %v66
  %v70 = vld [vmem:[%s1] sm:$0xff]
  %v71 = vld [vmem:[%s1 + $0x8] sm:$0xff]
  %v72 = vld [vmem:[%s4] sm:$0xff]
  %v73 = vld [vmem:[%s4 + $0x8] sm:$0xff]
  %v74 = vld [vmem:[%s5] sm:$0x1]
  %v76 = vperm.slane %v74, 0
  %vm78 = vcmask 130048
  %v80 = vsel %vm78, %v70, 0
  %v83 = vsel %vm78, %v71, 0
  %85 = vmatpush.msra.mxu0 0.0
  %86 = vmatpush.msra.mxu0 0.0
  %87 = vmatpush.msra.mxu0 0.0
  %88 = vmatpush.msra.mxu0 0.0
  %89 = vmatpush.msra.mxu0 0.0
  %90 = vmatpush.msra.mxu0 0.0
  %91 = vmatpush.msra.mxu0 0.0
  %92 = vmatpush.msra.mxu0 0.0
  %93 = vmatpush.msra.mxu0 0.0
  %94 = vmatpush.msra.mxu0 0.0
  %95 = vmatpush.msra.mxu0 0.0
  %96 = vmatpush.msra.mxu0 0.0
  %97 = vmatpush.msra.mxu0 0.0
  %98 = vmatpush.msra.mxu0 0.0
  %99 = vmatpush.msra.mxu0 %v73
  %100 = vmatpush.msra.mxu0 %v72
  %101 = vmatmul.f32.gmra.mxu0 %v80
  %v102 = vpop.f32.mrf.mxu0
  %v103 = vadd.f32 %v76, %v102
  %104 = vmatmul.f32.gmra.mxu0 %v83
  %v105 = vpop.f32.mrf.mxu0
  %v106 = vadd.f32 %v76, %v105
  %107 = vdwg.mxu0
  %v108 = vtanh.pop %v103
  %v109 = vtanh.pop %v106
  %110 = vst.msk [vmem:[%s7] sm:$0xff] %vm35, %v108
  %111 = vst.msk [vmem:[%s7 + $0x8] sm:$0xff] %vm35, %v109
  // Predicated region
  $region26: #{encoder_forward.2} parent=0 // pred_check
    _
  $region27: #{encoder_forward.2} parent=0 // pred_check_branch
    %113 = sbr.rel (0) target = $region29
  $region28: #{encoder_forward.2} parent=0 // pred_region
    _
  $region29: #{encoder_forward.2} parent=0 // pred_fallthru
    _
  // Predicated region
  $region30: #{encoder_forward.2} parent=0 // pred_check
    _
  $region31: #{encoder_forward.2} parent=0 // pred_check_branch
    %115 = sbr.rel (0) target = $region33
  $region32: #{encoder_forward.2} parent=0 // pred_region
    _
  $region33: #{encoder_forward.2} parent=0 // pred_fallthru
    _
  // Predicated region
  $region34: #{encoder_forward.2} parent=0 // pred_check
    _
  $region35: #{encoder_forward.2} parent=0 // pred_check_branch
    %117 = sbr.rel (0) target = $region37
  $region36: #{encoder_forward.2} parent=0 // pred_region
    _
  $region37: #{encoder_forward.2} parent=0 // pred_fallthru
    _
  // Predicated region
  $region38: #{encoder_forward.2} parent=0 // pred_check
    _
  $region39: #{encoder_forward.2} parent=0 // pred_check_branch
    %119 = sbr.rel (0) target = $region41
  $region40: #{encoder_forward.2} parent=0 // pred_region
    _
  $region41: #{encoder_forward.2} parent=0 // pred_fallthru
    _

// kernel: encoder_forward.3
$region0: #{encoder_forward.3}
  #allocation0 [shape = 'u32[]', space=smem, size = 0x4, offset = 0x4, fixed_abs, tag = 'smem constant byte address 0x4 - core index']
  #allocation1 [shape = 'u32[72,128]{1,0:T(1,128)}', space=vmem, size = 0x9000, scoped, tag = 'internal scratch']
  #allocation2 [shape = 'f32[16,1,64]{2,1,0:T(1,128)}', space=vmem, size = 0x2000, scoped, tag = 'scratch operand']
  #allocation3 [shape = 'f32[16,1,32]{2,1,0:T(1,128)}', space=vmem, size = 0x2000, scoped, tag = 'scratch operand']
  #allocation4 [shape = 's32[10]{0:T(128)}', space=smem, size = 0x200, scoped, tag = 'scratch operand']
  #allocation5 [shape = 's32[3]{0:T(128)}', space=smem, size = 0x200, scoped, tag = 'scratch operand']
  #allocation6 [shape = 's32[1]{0}', space=sflag, size = 0x4, scoped, tag = 'scoped memory for encoder_forward.3']
  #allocation7 [shape = 'u8[1024]{0}', space=smem, size = 0x400, scoped, tag = 'prefetched SMEM operand 0']
  %s0 = inlined_call_operand.vmem [shape: s32[2,15], index: 0, kind: input, shape index: {}]
  %s1 = inlined_call_operand.vmem [shape: f32[2,9,1,64], index: 1, kind: input, shape index: {}]
  %s2 = inlined_call_operand.vmem [shape: f32[2,9,1,32], index: 2, kind: input, shape index: {}]
  %s3 = inlined_call_operand.vmem [shape: f32[2,15,1,16], index: 3, kind: input, shape index: {}]
  %s4 = inlined_call_operand.vmem [shape: f32[80,160], index: 4, kind: input, shape index: {}]
  %s5 = inlined_call_operand.vmem [shape: f32[1,160], index: 5, kind: input, shape index: {}]
  %s6 = inlined_call_operand.vmem [shape: f32[48,80], index: 6, kind: input, shape index: {}]
  %s7 = inlined_call_operand.vmem [shape: f32[1,80], index: 7, kind: input, shape index: {}]
  %s8 = inlined_call_operand.hbm [shape: f32[2,1,32], index: 8, kind: output, shape index: {}]
  %s9 = sld [smem:[#allocation0]]
  $region80: #{encoder_forward.3} parent=0
    _
  %s11 = ssub.s32 1, %s9
  %s12 = scalar_select 0, %s11, %s9
  %s14 = sshll.u32 %s0, 4
  %s15 = int_to_ptr.vmem [resolvable:$true] %s14
  %17 = dma.vmem_to_smem %s15, 32, [#allocation7], [#allocation6]
  %19 = dma.done [#allocation6], 32
  %20 = sfence
  $region1: #{encoder_forward.3} parent=0
    #allocation8 [shape = 'u8[1024]{0}', space=vmem, size = 0x400, scoped, tag = 'output window, operand 0']
    #allocation9 [shape = 's32[2]{0}', space=sflag, size = 0x8, scoped, tag = 'scoped memory for encoder_forward.3']
    %21 = vsyncpa [#allocation9], 0
    %s22 = scalar_lea.sflag [#allocation9], 1
    %23 = vsyncpa %s22, 0
    loop: start=0, step=1, limit=4
    $region2: #{encoder_forward.3} parent=1 // loop_pre_header
      _
    $region3: #{encoder_forward.3} parent=1 // loop_header
      %s25 = sphi 0, %s29
      %p26 = scmp.ge.s32.totalorder %s25, 4
      %s35 = sphi 0, %s37
      %s38 = sphi 0, %s35
      %s39 = sphi 0, %s38
      %s55 = sphi 0, %s39
      %s61 = sphi 0, %s63
      %s64 = sphi 0, %s61
      %s65 = sphi 0, %s64
      %s81 = sphi 0, %s65
      %s87 = sphi 0, %s89
      %s90 = sphi 0, %s87
      %s91 = sphi 0, %s90
      %s107 = sphi 0, %s91
      %s111 = sphi 0, %s111
      %s113 = sphi 0, %s111
      %s114 = sphi 0, %s113
      %s128 = sphi 0, %s114
      %s132 = sphi 0, %s132
      %s134 = sphi 0, %s132
      %s135 = sphi 0, %s134
      %s149 = sphi 0, %s135
      %s153 = sphi 0, %s153
      %s155 = sphi 0, %s153
      %s156 = sphi 0, %s155
      %s170 = sphi 0, %s156
      %s174 = sphi 0, %s174
      %s176 = sphi 0, %s174
      %s177 = sphi 0, %s176
      %s191 = sphi 0, %s177
      %s197 = sphi 0, %s199
      %s200 = sphi 0, %s197
      %s201 = sphi 0, %s200
      %s217 = sphi 0, %s201
    $region4: #{encoder_forward.3} parent=1 // loop_header_branch
      %28 = sbr.rel (%p26) target = $region8
    $region5: #{encoder_forward.3} parent=1 // loop_body
      %s30 = ssub.s32 %s25, 1
      %s31 = ssub.s32 %s25, 2
      %s32 = sadd.s32 %s25, 1
      %s33 = ssub.s32 %s25, %s32
      %p34 = scmp.eq.s32.totalorder %s33, 0
      %s36 = sadd.s32 %s35, 1
      %s37 = scalar_select %p34, %s35, %s36
      %p40 = pneg %p34
      %p41 = scmp.eq.s32.totalorder %s25, 1
      %p42 = por %p40, %p41
      %p43 = scmp.ne.s32.totalorder %s35, %s38
      %p44 = scmp.eq.s32.totalorder %s25, 0
      %p45 = por %p43, %p44
      %p46 = scmp.ne.s32.totalorder %s35, %s38
      %p47 = scmp.eq.s32.totalorder %s30, 1
      %p48 = por %p46, %p47
      %p49 = scmp.ne.s32.totalorder %s38, %s39
      %p50 = scmp.eq.s32.totalorder %s30, 0
      %p51 = por %p49, %p50
      %p52 = scmp.ne.s32.totalorder %s38, %s39
      %p53 = scmp.eq.s32.totalorder %s31, 1
      %p54 = por %p52, %p53
      %p56 = scmp.ne.s32.totalorder %s39, %s55
      %p57 = scmp.eq.s32.totalorder %s31, 0
      %p58 = por %p56, %p57
      %s59 = ssub.s32 %s25, %s32
      %p60 = scmp.eq.s32.totalorder %s59, 0
      %s62 = sadd.s32 %s61, 1
      %s63 = scalar_select %p60, %s61, %s62
      %p66 = pneg %p60
      %p67 = scmp.eq.s32.totalorder %s25, 1
      %p68 = por %p66, %p67
      %p69 = scmp.ne.s32.totalorder %s61, %s64
      %p70 = scmp.eq.s32.totalorder %s25, 0
      %p71 = por %p69, %p70
      %p72 = scmp.ne.s32.totalorder %s61, %s64
      %p73 = scmp.eq.s32.totalorder %s30, 1
      %p74 = por %p72, %p73
      %p75 = scmp.ne.s32.totalorder %s64, %s65
      %p76 = scmp.eq.s32.totalorder %s30, 0
      %p77 = por %p75, %p76
      %p78 = scmp.ne.s32.totalorder %s64, %s65
      %p79 = scmp.eq.s32.totalorder %s31, 1
      %p80 = por %p78, %p79
      %p82 = scmp.ne.s32.totalorder %s65, %s81
      %p83 = scmp.eq.s32.totalorder %s31, 0
      %p84 = por %p82, %p83
      %s85 = ssub.s32 %s25, %s32
      %p86 = scmp.eq.s32.totalorder %s85, 0
      %s88 = sadd.s32 %s87, 1
      %s89 = scalar_select %p86, %s87, %s88
      %p92 = pneg %p86
      %p93 = scmp.eq.s32.totalorder %s25, 1
      %p94 = por %p92, %p93
      %p95 = scmp.ne.s32.totalorder %s87, %s90
      %p96 = scmp.eq.s32.totalorder %s25, 0
      %p97 = por %p95, %p96
      %p98 = scmp.ne.s32.totalorder %s87, %s90
      %p99 = scmp.eq.s32.totalorder %s30, 1
      %p100 = por %p98, %p99
      %p101 = scmp.ne.s32.totalorder %s90, %s91
      %p102 = scmp.eq.s32.totalorder %s30, 0
      %p103 = por %p101, %p102
      %p104 = scmp.ne.s32.totalorder %s90, %s91
      %p105 = scmp.eq.s32.totalorder %s31, 1
      %p106 = por %p104, %p105
      %p108 = scmp.ne.s32.totalorder %s91, %s107
      %p109 = scmp.eq.s32.totalorder %s31, 0
      %p110 = por %p108, %p109
      %s112 = sadd.s32 %s111, 1
      %p115 = scmp.eq.s32.totalorder %s25, 1
      %p116 = scmp.ne.s32.totalorder %s111, %s113
      %p117 = scmp.eq.s32.totalorder %s25, 0
      %p118 = por %p116, %p117
      %p119 = scmp.ne.s32.totalorder %s111, %s113
      %p120 = scmp.eq.s32.totalorder %s30, 1
      %p121 = por %p119, %p120
      %p122 = scmp.ne.s32.totalorder %s113, %s114
      %p123 = scmp.eq.s32.totalorder %s30, 0
      %p124 = por %p122, %p123
      %p125 = scmp.ne.s32.totalorder %s113, %s114
      %p126 = scmp.eq.s32.totalorder %s31, 1
      %p127 = por %p125, %p126
      %p129 = scmp.ne.s32.totalorder %s114, %s128
      %p130 = scmp.eq.s32.totalorder %s31, 0
      %p131 = por %p129, %p130
      %s133 = sadd.s32 %s132, 1
      %p136 = scmp.eq.s32.totalorder %s25, 1
      %p137 = scmp.ne.s32.totalorder %s132, %s134
      %p138 = scmp.eq.s32.totalorder %s25, 0
      %p139 = por %p137, %p138
      %p140 = scmp.ne.s32.totalorder %s132, %s134
      %p141 = scmp.eq.s32.totalorder %s30, 1
      %p142 = por %p140, %p141
      %p143 = scmp.ne.s32.totalorder %s134, %s135
      %p144 = scmp.eq.s32.totalorder %s30, 0
      %p145 = por %p143, %p144
      %p146 = scmp.ne.s32.totalorder %s134, %s135
      %p147 = scmp.eq.s32.totalorder %s31, 1
      %p148 = por %p146, %p147
      %p150 = scmp.ne.s32.totalorder %s135, %s149
      %p151 = scmp.eq.s32.totalorder %s31, 0
      %p152 = por %p150, %p151
      %s154 = sadd.s32 %s153, 1
      %p157 = scmp.eq.s32.totalorder %s25, 1
      %p158 = scmp.ne.s32.totalorder %s153, %s155
      %p159 = scmp.eq.s32.totalorder %s25, 0
      %p160 = por %p158, %p159
      %p161 = scmp.ne.s32.totalorder %s153, %s155
      %p162 = scmp.eq.s32.totalorder %s30, 1
      %p163 = por %p161, %p162
      %p164 = scmp.ne.s32.totalorder %s155, %s156
      %p165 = scmp.eq.s32.totalorder %s30, 0
      %p166 = por %p164, %p165
      %p167 = scmp.ne.s32.totalorder %s155, %s156
      %p168 = scmp.eq.s32.totalorder %s31, 1
      %p169 = por %p167, %p168
      %p171 = scmp.ne.s32.totalorder %s156, %s170
      %p172 = scmp.eq.s32.totalorder %s31, 0
      %p173 = por %p171, %p172
      %s175 = sadd.s32 %s174, 1
      %p178 = scmp.eq.s32.totalorder %s25, 1
      %p179 = scmp.ne.s32.totalorder %s174, %s176
      %p180 = scmp.eq.s32.totalorder %s25, 0
      %p181 = por %p179, %p180
      %p182 = scmp.ne.s32.totalorder %s174, %s176
      %p183 = scmp.eq.s32.totalorder %s30, 1
      %p184 = por %p182, %p183
      %p185 = scmp.ne.s32.totalorder %s176, %s177
      %p186 = scmp.eq.s32.totalorder %s30, 0
      %p187 = por %p185, %p186
      %p188 = scmp.ne.s32.totalorder %s176, %s177
      %p189 = scmp.eq.s32.totalorder %s31, 1
      %p190 = por %p188, %p189
      %p192 = scmp.ne.s32.totalorder %s177, %s191
      %p193 = scmp.eq.s32.totalorder %s31, 0
      %p194 = por %p192, %p193
      %s195 = ssub.s32 %s25, %s32
      %p196 = scmp.eq.s32.totalorder %s195, 0
      %s198 = sadd.s32 %s197, 1
      %s199 = scalar_select %p196, %s197, %s198
      %p202 = pneg %p196
      %p203 = scmp.eq.s32.totalorder %s25, 1
      %p204 = por %p202, %p203
      %p205 = scmp.ne.s32.totalorder %s197, %s200
      %p206 = scmp.eq.s32.totalorder %s25, 0
      %p207 = por %p205, %p206
      %p208 = scmp.ne.s32.totalorder %s197, %s200
      %p209 = scmp.eq.s32.totalorder %s30, 1
      %p210 = por %p208, %p209
      %p211 = scmp.ne.s32.totalorder %s200, %s201
      %p212 = scmp.eq.s32.totalorder %s30, 0
      %p213 = por %p211, %p212
      %p214 = scmp.ne.s32.totalorder %s200, %s201
      %p215 = scmp.eq.s32.totalorder %s31, 1
      %p216 = por %p214, %p215
      %p218 = scmp.ne.s32.totalorder %s201, %s217
      %p219 = scmp.eq.s32.totalorder %s31, 0
      %p220 = por %p218, %p219
      %p221 = scmp.le.s32.totalorder 1, %s25
      %p222 = scmp.lt.s32.totalorder %s25, 3
      %p223 = pnand %p221, %p222
      %p224 = pneg %p223
      // Predicated region
      $region9: #{encoder_forward.3} parent=5 // pred_check
        _
      $region10: #{encoder_forward.3} parent=5 // pred_check_branch
        %226 = sbr.rel (%p223) target = $region12
      $region11: #{encoder_forward.3} parent=5 // pred_region
        %s227 = ssub.s32 %s25, 1
        // Predicated region
        $region13: #{encoder_forward.3} parent=11 // pred_check
          %p228 = pneg %p124
        $region14: #{encoder_forward.3} parent=11 // pred_check_branch
          %230 = sbr.rel (%p228) target = $region16
        $region15: #{encoder_forward.3} parent=11 // pred_region
          _
        $region16: #{encoder_forward.3} parent=11 // pred_fallthru
          _
        // Predicated region
        $region17: #{encoder_forward.3} parent=11 // pred_check
          %p231 = pneg %p145
        $region18: #{encoder_forward.3} parent=11 // pred_check_branch
          %233 = sbr.rel (%p231) target = $region20
        $region19: #{encoder_forward.3} parent=11 // pred_region
          _
        $region20: #{encoder_forward.3} parent=11 // pred_fallthru
          _
        // Predicated region
        $region21: #{encoder_forward.3} parent=11 // pred_check
          %p234 = pneg %p166
        $region22: #{encoder_forward.3} parent=11 // pred_check_branch
          %236 = sbr.rel (%p234) target = $region24
        $region23: #{encoder_forward.3} parent=11 // pred_region
          _
        $region24: #{encoder_forward.3} parent=11 // pred_fallthru
          _
        // Predicated region
        $region25: #{encoder_forward.3} parent=11 // pred_check
          %p237 = pneg %p187
        $region26: #{encoder_forward.3} parent=11 // pred_check_branch
          %239 = sbr.rel (%p237) target = $region28
        $region27: #{encoder_forward.3} parent=11 // pred_region
          _
        $region28: #{encoder_forward.3} parent=11 // pred_fallthru
          _
      $region12: #{encoder_forward.3} parent=5 // pred_fallthru
        _
      %p240 = scmp.lt.s32.totalorder %s25, 2
      // Predicated region
      $region29: #{encoder_forward.3} parent=5 // pred_check
        %p241 = pneg %p240
      $region30: #{encoder_forward.3} parent=5 // pred_check_branch
        %243 = sbr.rel (%p241) target = $region32
      $region31: #{encoder_forward.3} parent=5 // pred_region
        // Predicated region
        $region33: #{encoder_forward.3} parent=31 // pred_check
          %p244 = pneg %p45
        $region34: #{encoder_forward.3} parent=31 // pred_check_branch
          %246 = sbr.rel (%p244) target = $region36
        $region35: #{encoder_forward.3} parent=31 // pred_region
          %p247 = scmp.lt.s32.totalorder %s25, 1
          %s248 = scalar_select %p247, %s25, 1
          %s249 = smul.addr %s248, 9
          %s250 = scalar_lea.vmem %s1, %s249
        $region36: #{encoder_forward.3} parent=31 // pred_fallthru
          _
        // Predicated region
        $region37: #{encoder_forward.3} parent=31 // pred_check
          %p251 = pneg %p71
        $region38: #{encoder_forward.3} parent=31 // pred_check_branch
          %253 = sbr.rel (%p251) target = $region40
        $region39: #{encoder_forward.3} parent=31 // pred_region
          %p254 = scmp.lt.s32.totalorder %s25, 1
          %s255 = scalar_select %p254, %s25, 1
          %s256 = smul.addr %s255, 9
          %s257 = scalar_lea.vmem %s2, %s256
        $region40: #{encoder_forward.3} parent=31 // pred_fallthru
          _
        // Predicated region
        $region41: #{encoder_forward.3} parent=31 // pred_check
          %p258 = pneg %p97
        $region42: #{encoder_forward.3} parent=31 // pred_check_branch
          %260 = sbr.rel (%p258) target = $region44
        $region43: #{encoder_forward.3} parent=31 // pred_region
          %p261 = scmp.lt.s32.totalorder %s25, 1
          %s262 = scalar_select %p261, %s25, 1
          %s263 = smul.addr %s262, 15
          %s264 = scalar_lea.vmem %s3, %s263
        $region44: #{encoder_forward.3} parent=31 // pred_fallthru
          _
      $region32: #{encoder_forward.3} parent=5 // pred_fallthru
        _
      %p265 = scmp.le.s32.totalorder 1, %s25
      %p266 = scmp.lt.s32.totalorder %s25, 3
      %p267 = pnand %p265, %p266
      %p268 = pneg %p267
      // Predicated region
      $region45: #{encoder_forward.3} parent=5 // pred_check
        _
      $region46: #{encoder_forward.3} parent=5 // pred_check_branch
        %270 = sbr.rel (%p267) target = $region48
      $region47: #{encoder_forward.3} parent=5 // pred_region
        %s271 = ssub.s32 %s25, 1
        %p272 = scmp.lt.s32.totalorder %s30, 1
        %s273 = scalar_select %p272, %s30, 1
        %s274 = smul.addr %s273, 9
        %s275 = scalar_lea.vmem %s1, %s274
        %p276 = pneg %p51
        %p277 = pneg %p48
        %p278 = scmp.lt.s32.totalorder %s30, 1
        %s279 = scalar_select %p278, %s30, 1
        %s280 = smul.addr %s279, 9
        %s281 = scalar_lea.vmem %s2, %s280
        %p282 = pneg %p77
        %p283 = pneg %p74
        %p284 = scmp.lt.s32.totalorder %s30, 1
        %s285 = scalar_select %p284, %s30, 1
        %s286 = smul.addr %s285, 15
        %s287 = scalar_lea.vmem %s3, %s286
        %p288 = pneg %p103
        %p289 = pneg %p100
        %p290 = pneg %p124
        %p291 = pneg %p121
        %p292 = pneg %p145
        %p293 = pneg %p142
        %p294 = pneg %p166
        %p295 = pneg %p163
        %p296 = pneg %p187
        %p297 = pneg %p184
        %p298 = pneg %p213
        %p299 = pneg %p210
        %s300 = sand.u32 %s200, 1
        %s301 = scalar_lea.sflag [#allocation9], %s300
        %s302 = sand.u32 %s200, 1
        %s303 = scalar_lea.vmem [#allocation8], %s302
        %p304 = scmp.lt.s32.totalorder %s30, 1
        %s305 = scalar_select %p304, %s30, 1
        %s306 = smul.addr %s305, 9
        %s307 = scalar_lea.vmem %s1, %s306
        %p308 = scmp.lt.s32.totalorder %s30, 1
        %s309 = scalar_select %p308, %s30, 1
        %s310 = smul.addr %s309, 9
        %s311 = scalar_lea.vmem %s2, %s310
        %p312 = scmp.lt.s32.totalorder %s30, 1
        %s313 = scalar_select %p312, %s30, 1
        %s314 = smul.addr %s313, 15
        %s315 = scalar_lea.vmem %s3, %s314
        %vm316 = vcmask 516096
        %317 = vst.msk [vmem:[#allocation2] sm:$0x1] %vm316, 0.0
        %318 = vst.msk [vmem:[#allocation2 + $0x1] sm:$0x1] %vm316, 0.0
        %319 = vst.msk [vmem:[#allocation2 + $0x2] sm:$0x1] %vm316, 0.0
        %320 = vst.msk [vmem:[#allocation2 + $0x3] sm:$0x1] %vm316, 0.0
        %321 = vst.msk [vmem:[#allocation2 + $0x4] sm:$0x1] %vm316, 0.0
        %322 = vst.msk [vmem:[#allocation2 + $0x5] sm:$0x1] %vm316, 0.0
        %323 = vst.msk [vmem:[#allocation2 + $0x6] sm:$0x1] %vm316, 0.0
        %324 = vst.msk [vmem:[#allocation2 + $0x7] sm:$0x1] %vm316, 0.0
        %325 = vst.msk [vmem:[#allocation2 + $0x8] sm:$0x1] %vm316, 0.0
        %326 = vst.msk [vmem:[#allocation2 + $0x9] sm:$0x1] %vm316, 0.0
        %327 = vst.msk [vmem:[#allocation2 + $0xa] sm:$0x1] %vm316, 0.0
        %328 = vst.msk [vmem:[#allocation2 + $0xb] sm:$0x1] %vm316, 0.0
        %329 = vst.msk [vmem:[#allocation2 + $0xc] sm:$0x1] %vm316, 0.0
        %330 = vst.msk [vmem:[#allocation2 + $0xd] sm:$0x1] %vm316, 0.0
        %331 = vst.msk [vmem:[#allocation2 + $0xe] sm:$0x1] %vm316, 0.0
        %332 = vst.msk [vmem:[#allocation2 + $0xf] sm:$0x1] %vm316, 0.0
        %vm333 = vcmask 253952
        %334 = vst.msk [vmem:[#allocation3] sm:$0x1] %vm333, 0.0
        %335 = vst.msk [vmem:[#allocation3 + $0x1] sm:$0x1] %vm333, 0.0
        %336 = vst.msk [vmem:[#allocation3 + $0x2] sm:$0x1] %vm333, 0.0
        %337 = vst.msk [vmem:[#allocation3 + $0x3] sm:$0x1] %vm333, 0.0
        %338 = vst.msk [vmem:[#allocation3 + $0x4] sm:$0x1] %vm333, 0.0
        %339 = vst.msk [vmem:[#allocation3 + $0x5] sm:$0x1] %vm333, 0.0
        %340 = vst.msk [vmem:[#allocation3 + $0x6] sm:$0x1] %vm333, 0.0
        %341 = vst.msk [vmem:[#allocation3 + $0x7] sm:$0x1] %vm333, 0.0
        %342 = vst.msk [vmem:[#allocation3 + $0x8] sm:$0x1] %vm333, 0.0
        %343 = vst.msk [vmem:[#allocation3 + $0x9] sm:$0x1] %vm333, 0.0
        %344 = vst.msk [vmem:[#allocation3 + $0xa] sm:$0x1] %vm333, 0.0
        %345 = vst.msk [vmem:[#allocation3 + $0xb] sm:$0x1] %vm333, 0.0
        %346 = vst.msk [vmem:[#allocation3 + $0xc] sm:$0x1] %vm333, 0.0
        %347 = vst.msk [vmem:[#allocation3 + $0xd] sm:$0x1] %vm333, 0.0
        %348 = vst.msk [vmem:[#allocation3 + $0xe] sm:$0x1] %vm333, 0.0
        %349 = vst.msk [vmem:[#allocation3 + $0xf] sm:$0x1] %vm333, 0.0
        %s350 = scalar_lea.smem [#allocation4], 0
        %351 = sst [smem:[%s350]] 0
        %s352 = scalar_lea.smem [#allocation4], 1
        %353 = sst [smem:[%s352]] 0
        %s354 = scalar_lea.smem [#allocation4], 2
        %355 = sst [smem:[%s354]] 0
        %s356 = scalar_lea.smem [#allocation4], 3
        %357 = sst [smem:[%s356]] 0
        %s358 = scalar_lea.smem [#allocation4], 4
        %359 = sst [smem:[%s358]] 0
        %s360 = scalar_lea.smem [#allocation4], 5
        %361 = sst [smem:[%s360]] 0
        %s362 = scalar_lea.smem [#allocation4], 6
        %363 = sst [smem:[%s362]] 0
        %s364 = scalar_lea.smem [#allocation4], 7
        %365 = sst [smem:[%s364]] 0
        %s366 = scalar_lea.smem [#allocation4], 8
        %367 = sst [smem:[%s366]] 0
        %s368 = scalar_lea.smem [#allocation4], 9
        %369 = sst [smem:[%s368]] 0
        %s370 = scalar_lea.smem [#allocation5], 0
        %371 = sst [smem:[%s370]] 0
        %s372 = scalar_lea.smem [#allocation5], 1
        %373 = sst [smem:[%s372]] 1
        %s374 = scalar_lea.smem [#allocation5], 2
        %375 = sst [smem:[%s374]] 0
        %v376 = vld [vmem:[%s307] sm:$0x1]
        %377 = vst.msk [vmem:[#allocation2] sm:$0x1] %vm316, %v376
        loop: start=1, step=1, limit=16
        $region49: #{encoder_forward.3} parent=47 // loop_pre_header
          _
        $region50: #{encoder_forward.3} parent=47 // loop_header
          %s379 = sphi 1, %s383
          %p380 = scmp.ge.s32.totalorder %s379, 16
        $region51: #{encoder_forward.3} parent=47 // loop_header_branch
          %382 = sbr.rel (%p380) target = $region55
        $region52: #{encoder_forward.3} parent=47 // loop_body
          %s384 = ssub.s32 %s379, 1
          %s385 = sshra.s32 %s384, 7
          %s386 = sand.u32 %s384, 127
          %s387 = sadd.s32 %s385, %s30
          %s388 = smul.u32 %s387, 128
          %s389 = sshra.s32 %s384, 7
          %s390 = sand.u32 %s384, 127
          %s391 = sadd.s32 %s388, %s390
          %s392 = sld [smem:[#allocation7 + %s391]]
          %p393 = scmp.eq.s32.totalorder %s392, 1
          %p394 = scmp.eq.s32.totalorder %s392, 2
          %p395 = por %p393, %p394
          %p396 = pneg %p395
          // Predicated region
          $region56: #{encoder_forward.3} parent=52 // pred_check
            _
          $region57: #{encoder_forward.3} parent=52 // pred_check_branch
            %398 = sbr.rel (%p395) target = $region59
          $region58: #{encoder_forward.3} parent=52 // pred_region
            %s399 = scalar_lea.vmem [#allocation2], %s384
            %v400 = vld [vmem:[%s399] sm:$0x1]
            %s401 = scalar_lea.vmem [#allocation2], %s379
            %402 = vst.msk [vmem:[%s401] sm:$0x1] %vm316, %v400
          $region59: #{encoder_forward.3} parent=52 // pred_fallthru
            _
          // Predicated region
          $region60: #{encoder_forward.3} parent=52 // pred_check
            %p403 = pneg %p393
          $region61: #{encoder_forward.3} parent=52 // pred_check_branch
            %405 = sbr.rel (%p403) target = $region63
          $region62: #{encoder_forward.3} parent=52 // pred_region
            %s406 = sld [smem:[#allocation5]]
            %s407 = scalar_lea.vmem %s307, %s406
            %v408 = vld [vmem:[%s407] sm:$0x1]
            %s409 = scalar_lea.vmem [#allocation2], %s379
            %410 = vst.msk [vmem:[%s409] sm:$0x1] %vm316, %v408
            %s411 = scalar_lea.vmem %s311, %s406
            %v412 = vld [vmem:[%s411] sm:$0x1]
            %s413 = scalar_lea.vmem [#allocation3], %s379
            %414 = vst.msk [vmem:[%s413] sm:$0x1] %vm333, %v412
            %s415 = sadd.s32 %s406, 1
            %416 = sst [smem:[%s370]] %s415
            %s417 = sld [smem:[#allocation5 + $0x1]]
            %s418 = sadd.s32 %s417, 1
            %419 = sst [smem:[%s372]] %s418
            %s420 = scalar_lea.smem [#allocation4], %s418
            %421 = sst [smem:[%s420]] %s379
          $region63: #{encoder_forward.3} parent=52 // pred_fallthru
            _
          // Predicated region
          $region64: #{encoder_forward.3} parent=52 // pred_check
            %p422 = pneg %p394
          $region65: #{encoder_forward.3} parent=52 // pred_check_branch
            %424 = sbr.rel (%p422) target = $region67
          $region66: #{encoder_forward.3} parent=52 // pred_region
            %s425 = sld [smem:[#allocation5 + $0x1]]
            %s426 = ssub.s32 %s425, 1
            %s427 = sld [smem:[#allocation4 + %s426]]
            %s428 = sld [smem:[#allocation4 + %s425]]
            %s429 = scalar_lea.vmem [#allocation2], %s427
            %v430 = vld [vmem:[%s429] sm:$0x1]
            %s431 = scalar_lea.vmem [#allocation2], %s428
            %v432 = vld [vmem:[%s431] sm:$0x1]
            %s433 = scalar_lea.vmem [#allocation3], %s427
            %v434 = vld [vmem:[%s433] sm:$0x1]
            %s435 = scalar_lea.vmem [#allocation3], %s428
            %v436 = vld [vmem:[%s435] sm:$0x1]
            %s437 = sld [smem:[#allocation5 + $0x2]]
            %s438 = scalar_lea.vmem %s315, %s437
            %v439 = vld [vmem:[%s438] sm:$0x1]
            %v441 = vperm.slane %v436, 0
            %442 = vrot.lane.b32.xlu0 %v441, 16
            %v443 = vpop.permute.xlu0 %442
            %v446 = vperm.slane %v439, 0
            %447 = vrot.lane.b32.xlu0 %v446, 32
            %v448 = vpop.permute.xlu0 %447
            %vm450 = vcmask 130048
            %v451 = vsel %vm450, %v434, %v443
            %vm452 = vcmask 261120
            %v453 = vsel %vm452, %v451, %v448
            %v454 = vld [vmem:[%s6] sm:$0xff]
            %v455 = vld [vmem:[%s6 + $0x8] sm:$0xff]
            %v456 = vld [vmem:[%s6 + $0x10] sm:$0xff]
            %v457 = vld [vmem:[%s6 + $0x18] sm:$0xff]
            %v458 = vld [vmem:[%s6 + $0x20] sm:$0xff]
            %v459 = vld [vmem:[%s6 + $0x28] sm:$0xff]
            %v460 = vld [vmem:[%s7] sm:$0x1]
            %vm461 = vcmask 392192
            %v463 = vsel %vm461, %v453, 0
            %465 = vmatpush.msra.mxu0 0.0
            %466 = vmatpush.msra.mxu0 0.0
            %467 = vmatpush.msra.mxu0 0.0
            %468 = vmatpush.msra.mxu0 0.0
            %469 = vmatpush.msra.mxu0 0.0
            %470 = vmatpush.msra.mxu0 0.0
            %471 = vmatpush.msra.mxu0 0.0
            %472 = vmatpush.msra.mxu0 0.0
            %473 = vmatpush.msra.mxu0 0.0
            %474 = vmatpush.msra.mxu0 0.0
            %475 = vmatpush.msra.mxu0 %v459
            %476 = vmatpush.msra.mxu0 %v458
            %477 = vmatpush.msra.mxu0 %v457
            %478 = vmatpush.msra.mxu0 %v456
            %479 = vmatpush.msra.mxu0 %v455
            %480 = vmatpush.msra.mxu0 %v454
            %481 = vmatmul.f32.gmra.mxu0 %v463
            %v482 = vpop.f32.mrf.mxu0
            %v483 = vadd.f32 %v460, %v482
            %484 = vdwg.mxu0
            %v485 = vxor.u32 %v483, 2147483648
            %v486 = vmul.f32 %v485, 1.442695
            %v487 = vpow.pop %v486
            %v488 = vadd.f32 %v487, 1.0
            %v489 = vrcp.pop %v488
            %v490 = vmul.f32 %v488, %v489
            %v491 = vsub.f32 1.0, %v490
            %v492 = vmul.f32 %v489, %v491
            %v493 = vadd.f32 %v489, %v492
            %vm494 = vweird.f32 %v488
            %vm495 = vweird.f32 %v489
            %vm496 = vmor %vm494, %vm495
            %v497 = vsel %vm496, %v489, %v493
            %v498 = vand.u32 2147483647, %v488
            %vm499 = vcmp.eq.f32.partialorder %v498, 8.507059e+37
            %v500 = vand.u32 %v488, 2147483648
            %v501 = vor.u32 1.1754944e-38, %v500
            %v502 = vsel %vm499, %v501, %v497
            %v503 = vmul.f32 1.0, %v502
            %v504 = vtanh.pop %v483
            %506 = vrot.lane.b32.xlu0 %v504, 64
            %v507 = vpop.permute.xlu0 %506
            %v509 = vmul.f32 %v503, %v507
            %v510 = vmul.f32 %v503, %v434
            %512 = vrot.lane.b32.xlu0 %v510, 112
            %v513 = vpop.permute.xlu0 %512
            %v515 = vadd.f32 %v509, %v513
            %v516 = vmul.f32 %v503, %v443
            %518 = vrot.lane.b32.xlu0 %v516, 96
            %v519 = vpop.permute.xlu0 %518
            %v521 = vadd.f32 %v515, %v519
            %v522 = vtanh.pop %v521
            %524 = vrot.lane.b32.xlu0 %v522, 48
            %v525 = vpop.permute.xlu0 %524
            %v527 = vmul.f32 %v503, %v525
            %529 = vrot.lane.b32.xlu0 %v527, 80
            %v530 = vpop.permute.xlu0 %529
            %533 = vrot.lane.b32.xlu0 %v521, 16
            %v534 = vpop.permute.xlu0 %533
            %v536 = vsel %vm450, %v530, %v534
            %s537 = scalar_lea.vmem [#allocation3], %s379
            %538 = vst.msk [vmem:[%s537] sm:$0x1] %vm333, %v536
            %s539 = sadd.s32 %s437, 1
            %540 = sst [smem:[%s374]] %s539
            %v542 = vperm.slane %v432, 0
            %543 = vrot.lane.b32.xlu0 %v542, 32
            %v544 = vpop.permute.xlu0 %543
            %546 = vrot.lane.b32.xlu0 %v527, 16
            %v547 = vpop.permute.xlu0 %546
            %v549 = vsel %vm452, %v430, %v544
            %vm550 = vcmask 523264
            %v551 = vsel %vm550, %v549, %v547
            %v552 = vld [vmem:[%s4] sm:$0xff]
            %v553 = vld [vmem:[%s4 + $0x8] sm:$0xff]
            %v554 = vld [vmem:[%s4 + $0x10] sm:$0xff]
            %v555 = vld [vmem:[%s4 + $0x18] sm:$0xff]
            %v556 = vld [vmem:[%s4 + $0x20] sm:$0xff]
            %v557 = vld [vmem:[%s4 + $0x28] sm:$0xff]
            %v558 = vld [vmem:[%s4 + $0x30] sm:$0xff]
            %v559 = vld [vmem:[%s4 + $0x38] sm:$0xff]
            %v560 = vld [vmem:[%s4 + $0x40] sm:$0xff]
            %v561 = vld [vmem:[%s4 + $0x48] sm:$0xff]
            %v562 = vld [vmem:[%s4 + $0x50] sm:$0xff]
            %v563 = vld [vmem:[%s4 + $0x58] sm:$0xff]
            %v564 = vld [vmem:[%s4 + $0x60] sm:$0xff]
            %v565 = vld [vmem:[%s4 + $0x68] sm:$0xff]
            %v566 = vld [vmem:[%s4 + $0x70] sm:$0xff]
            %v567 = vld [vmem:[%s4 + $0x78] sm:$0xff]
            %v568 = vld [vmem:[%s4 + $0x80] sm:$0xff]
            %v569 = vld [vmem:[%s4 + $0x88] sm:$0xff]
            %v570 = vld [vmem:[%s4 + $0x90] sm:$0xff]
            %v571 = vld [vmem:[%s4 + $0x98] sm:$0xff]
            %v572 = vld [vmem:[%s5] sm:$0x3]
            %v574 = vperm.slane %v572, 0
            %v575 = vperm.slane %v572, 1
            %vm578 = vcmask 654336
            %v580 = vsel %vm578, %v551, 0
            %582 = vmatpush.msra.mxu0 0.0
            %583 = vmatpush.msra.mxu0 0.0
            %584 = vmatpush.msra.mxu0 0.0
            %585 = vmatpush.msra.mxu0 0.0
            %586 = vmatpush.msra.mxu0 0.0
            %587 = vmatpush.msra.mxu0 0.0
            %588 = vmatpush.msra.mxu0 %v570
            %589 = vmatpush.msra.mxu0 %v568
            %590 = vmatpush.msra.mxu0 %v566
            %591 = vmatpush.msra.mxu0 %v564
            %592 = vmatpush.msra.mxu0 %v562
            %593 = vmatpush.msra.mxu0 %v560
            %594 = vmatpush.msra.mxu0 %v558
            %595 = vmatpush.msra.mxu0 %v556
            %596 = vmatpush.msra.mxu0 %v554
            %597 = vmatpush.msra.mxu0 %v552
            %598 = vmatmul.f32.gmra.mxu0 %v580
            %v599 = vpop.f32.mrf.mxu0
            %v600 = vadd.f32 %v574, %v599
            %601 = vdwg.mxu0
            %602 = vmatpush.msra.mxu0 0.0
            %603 = vmatpush.msra.mxu0 0.0
            %604 = vmatpush.msra.mxu0 0.0
            %605 = vmatpush.msra.mxu0 0.0
            %606 = vmatpush.msra.mxu0 0.0
            %607 = vmatpush.msra.mxu0 0.0
            %608 = vmatpush.msra.mxu0 %v571
            %609 = vmatpush.msra.mxu0 %v569
            %610 = vmatpush.msra.mxu0 %v567
            %611 = vmatpush.msra.mxu0 %v565
            %612 = vmatpush.msra.mxu0 %v563
            %613 = vmatpush.msra.mxu0 %v561
            %614 = vmatpush.msra.mxu0 %v559
            %615 = vmatpush.msra.mxu0 %v557
            %616 = vmatpush.msra.mxu0 %v555
            %617 = vmatpush.msra.mxu0 %v553
            %618 = vmatmul.f32.gmra.mxu0 %v580
            %v619 = vpop.f32.mrf.mxu0
            %v620 = vadd.f32 %v575, %v619
            %621 = vdwg.mxu0
            %v622 = vxor.u32 %v600, 2147483648
            %v623 = vmul.f32 %v622, 1.442695
            %v624 = vpow.pop %v623
            %v625 = vadd.f32 %v624, 1.0
            %v626 = vrcp.pop %v625
            %v627 = vmul.f32 %v625, %v626
            %v628 = vsub.f32 1.0, %v627
            %v629 = vmul.f32 %v626, %v628
            %v630 = vadd.f32 %v626, %v629
            %vm631 = vweird.f32 %v625
            %vm632 = vweird.f32 %v626
            %vm633 = vmor %vm631, %vm632
            %v634 = vsel %vm633, %v626, %v630
            %v635 = vand.u32 2147483647, %v625
            %vm636 = vcmp.eq.f32.partialorder %v635, 8.507059e+37
            %v637 = vand.u32 %v625, 2147483648
            %v638 = vor.u32 1.1754944e-38, %v637
            %v639 = vsel %vm636, %v638, %v634
            %v640 = vmul.f32 1.0, %v639
            %v641 = vtanh.pop %v620
            %v642 = vmul.f32 %v640, %v641
            %v643 = vmul.f32 %v640, %v430
            %645 = vrot.lane.b32.xlu0 %v643, 96
            %v646 = vpop.permute.xlu0 %645
            %v648 = vadd.f32 %v642, %v646
            %v649 = vmul.f32 %v640, %v544
            %651 = vrot.lane.b32.xlu0 %v649, 64
            %v652 = vpop.permute.xlu0 %651
            %v654 = vadd.f32 %v648, %v652
            %v655 = vtanh.pop %v654
            %657 = vrot.lane.b32.xlu0 %v655, 96
            %v658 = vpop.permute.xlu0 %657
            %v660 = vmul.f32 %v640, %v658
            %662 = vrot.lane.b32.xlu0 %v660, 32
            %v663 = vpop.permute.xlu0 %662
            %666 = vrot.lane.b32.xlu0 %v654, 32
            %v667 = vpop.permute.xlu0 %666
            %v669 = vsel %vm452, %v663, %v667
            %s670 = scalar_lea.vmem [#allocation2], %s379
            %671 = vst.msk [vmem:[%s670] sm:$0x1] %vm316, %v669
            %672 = sst [smem:[%s372]] %s426
            %s673 = scalar_lea.smem [#allocation4], %s426
            %674 = sst [smem:[%s673]] %s379
          $region67: #{encoder_forward.3} parent=52 // pred_fallthru
            _
        $region53: #{encoder_forward.3} parent=47 // loop_footer
          %s383 = sadd.s32 1, %s379
        $region54: #{encoder_forward.3} parent=47 // loop_footer_branch
          %378 = sbr.rel target = $region50
        $region55: #{encoder_forward.3} parent=47 // loop_exit
          _
        %s675 = scalar_lea.vmem [#allocation2], 15
        %v676 = vld [vmem:[%s675] sm:$0x1]
        %677 = vst.msk [vmem:[%s303] sm:$0x1] %vm333, %v676
        %s678 = sand.u32 %s200, 1
        %s679 = scalar_lea.sflag [#allocation9], %s678
        %s680 = sand.u32 %s200, 1
        %s681 = scalar_lea.vmem [#allocation8], %s680
        // Predicated region
        $region68: #{encoder_forward.3} parent=47 // pred_check
          %p682 = pneg %p210
        $region69: #{encoder_forward.3} parent=47 // pred_check_branch
          %684 = sbr.rel (%p682) target = $region71
        $region70: #{encoder_forward.3} parent=47 // pred_region
          %686 = vsyncadd %s679, 0
          %s687 = scalar_lea.hbm %s8, %s30
          %s689 = sshll.u32 %s681, 4
          %s690 = int_to_ptr.vmem [resolvable:$true] %s689
          %s691 = sshll.u32 %s687, 4
          %s692 = int_to_ptr.hbm [resolvable:$true] %s691
          %694 = dma.vmem_to_hbm [thread:$0]  %s690, 16, %s692, %s679
        $region71: #{encoder_forward.3} parent=47 // pred_fallthru
          _
      $region48: #{encoder_forward.3} parent=5 // pred_fallthru
        _
      %p695 = scmp.le.s32.totalorder 2, %s25
      // Predicated region
      $region72: #{encoder_forward.3} parent=5 // pred_check
        %p696 = pneg %p695
      $region73: #{encoder_forward.3} parent=5 // pred_check_branch
        %698 = sbr.rel (%p696) target = $region75
      $region74: #{encoder_forward.3} parent=5 // pred_region
        %s699 = ssub.s32 %s25, 2
        // Predicated region
        $region76: #{encoder_forward.3} parent=74 // pred_check
          %p700 = pneg %p216
        $region77: #{encoder_forward.3} parent=74 // pred_check_branch
          %702 = sbr.rel (%p700) target = $region79
        $region78: #{encoder_forward.3} parent=74 // pred_region
          %s703 = sand.u32 %s201, 1
          %s704 = scalar_lea.sflag [#allocation9], %s703
          %s705 = sand.u32 %s201, 1
          %s706 = scalar_lea.vmem [#allocation8], %s705
          %708 = dma.done %s704, 16
        $region79: #{encoder_forward.3} parent=74 // pred_fallthru
          _
      $region75: #{encoder_forward.3} parent=5 // pred_fallthru
        _
    $region6: #{encoder_forward.3} parent=1 // loop_footer
      %s29 = sadd.s32 1, %s25
    $region7: #{encoder_forward.3} parent=1 // loop_footer_branch
      %24 = sbr.rel target = $region3
    $region8: #{encoder_forward.3} parent=1 // loop_exit
      _
    %709 = vsyncpa [#allocation9], 1
    %s710 = scalar_lea.sflag [#allocation9], 1
    %711 = vsyncpa %s710, 1

</llo_original>
